<compile_context>
chip_gen: v7x
topology: tpu7x:2x2x1
jax: 0.10.0
libtpu: 0.0.40
codegen_flags: <defaults>
</compile_context>

<pallas_src>
import functools

import jax
import jax.numpy as jnp
from jax.experimental import pallas as pl
from jax.experimental.pallas import tpu as pltpu

LN_EPS = 1e-5  # PyTorch nn.LayerNorm default


def _fused_kernel(x_ref, w_ref, b_ref, g_ref, bt_ref, ssum_ref, sbc_ref, o_ref,
                  *, th, W, ph, pwE):
    """x_ref:(C, th*W)  w_ref:(C, P*E) bf16  b/g/bt:(1, P*E) f32
    ssum:(P*E, P) f32  sbc:(P, P*E) f32  o_ref:(th, ph, W, pw*E)."""
    # --- projection: one MXU matmul, bf16 inputs, fp32 accumulation ----------
    x = x_ref[...].astype(jnp.bfloat16)                       # cast on VPU, no extra HBM traffic
    y = jax.lax.dot_general(x, w_ref[...],
                            (((0,), (0,)), ((), ())),         # contract C (lhs-transposed matmul)
                            preferred_element_type=jnp.float32)   # (th*W, P*E)
    y = y + b_ref[...]                                        # bias tiled over (kh, kw)

    # --- LayerNorm over each E-wide (kh, kw) column segment ------------------
    # Segment mean/var via tiny matmuls against 0/1 segment matrices: keeps
    # everything in the (rows, P*E) matmul layout (no lane-splitting reshape)
    # and runs on the MXU (fp32, exact).
    ssum = ssum_ref[...]                                      # (P*E, P), entries 1/E
    sbc = sbc_ref[...]                                        # (P, P*E), entries 0/1
    mean = jnp.dot(y, ssum, preferred_element_type=jnp.float32)       # (th*W, P)
    mean_f = jnp.dot(mean, sbc, preferred_element_type=jnp.float32)   # broadcast back
    xc = y - mean_f
    var = jnp.dot(xc * xc, ssum, preferred_element_type=jnp.float32)
    var_f = jnp.dot(var, sbc, preferred_element_type=jnp.float32)
    yn = xc * jax.lax.rsqrt(var_f + LN_EPS) * g_ref[...] + bt_ref[...]  # (th*W, P*E)

    # --- scatter into PyTorch token order ------------------------------------
    # out[hh, kh, w, kw*E + e] = yn[hh*W + w, kh*pw*E + kw*E + e]
    # Static unrolled loops (th, ph are small compile-time ints); every store is
    # a lane-dense (W, pw*E) slab with leading integer indices only.
    for hh in range(th):
        rows = yn[hh * W:(hh + 1) * W, :]                     # (W, P*E)
        for kh in range(ph):
            o_ref[hh, kh, :, :] = rows[:, kh * pwE:(kh + 1) * pwE].astype(o_ref.dtype)


def _pick_th(H, W, P, E, out_bytes=4, budget=2 * 1024 * 1024):
    """Rows of the input handled per grid step.

    Constraints: th divides H, and th*W is a multiple of 128 so the flattened
    (C, th*W) x-block is lane-aligned (th == H is always legal since the block
    then equals the full spatial extent).  Among valid th, take the largest one
    whose fp32 output tile stays under `budget` (keeps VMEM modest even on
    v7x's 64 MiB while amortizing the ~0.35us per-grid-step overhead).
    """
    cands = [t for t in range(1, H + 1) if H % t == 0 and (t * W) % 128 == 0]
    if not cands:
        return H
    fitting = [t for t in cands if t * P * W * E * out_bytes <= budget]
    return max(fitting) if fitting else min(cands)


def de_patch_embed(x_nchw, weight, bias, gamma, beta, patch_size):
    """x_nchw: (B, C, H, W).  weight: (C, E, ph, pw) (ConvTranspose2d layout).
    Returns (tokens (B, H*ph*W*pw, E), (H*ph, W*pw))."""
    B, C, H, W = x_nchw.shape
    ph, pw = patch_size
    E = weight.shape[1]
    P = ph * pw
    PE = P * E
    pwE = pw * E

    # --- parameter prep (all tiny; done once) --------------------------------
    x3 = x_nchw.reshape(B, C, H * W)                                       # free reshape
    w_mat = (jnp.transpose(weight, (0, 2, 3, 1))                           # (C, ph, pw, E)
             .reshape(C, PE).astype(jnp.bfloat16))                         # cols = (kh, kw, e)
    b_t = jnp.tile(bias.astype(jnp.float32), P).reshape(1, PE)
    g_t = jnp.tile(gamma.astype(jnp.float32), P).reshape(1, PE)
    bt_t = jnp.tile(beta.astype(jnp.float32), P).reshape(1, PE)
    seg = jnp.arange(PE, dtype=jnp.int32) // E
    ssum = (seg[:, None] == jnp.arange(P, dtype=jnp.int32)[None, :]
            ).astype(jnp.float32) / float(E)                               # (PE, P)
    sbc = (jnp.arange(P, dtype=jnp.int32)[:, None] == seg[None, :]
           ).astype(jnp.float32)                                           # (P, PE)

    th = _pick_th(H, W, P, E)
    grid = (B, H // th)

    kernel = functools.partial(_fused_kernel, th=th, W=W, ph=ph, pwE=pwE)

    out5 = pl.pallas_call(
        kernel,
        out_shape=jax.ShapeDtypeStruct((B, H, ph, W, pwE), x_nchw.dtype),
        grid=grid,
        in_specs=[
            pl.BlockSpec((None, C, th * W), lambda b, hb: (b, 0, hb)),   # x (NCHW, flattened HW)
            pl.BlockSpec((C, PE), lambda b, hb: (0, 0)),                 # weight (constant block)
            pl.BlockSpec((1, PE), lambda b, hb: (0, 0)),                 # bias tiled
            pl.BlockSpec((1, PE), lambda b, hb: (0, 0)),                 # gamma tiled
            pl.BlockSpec((1, PE), lambda b, hb: (0, 0)),                 # beta tiled
            pl.BlockSpec((PE, P), lambda b, hb: (0, 0)),                 # segment-sum matrix
            pl.BlockSpec((P, PE), lambda b, hb: (0, 0)),                 # segment-broadcast matrix
        ],
        out_specs=pl.BlockSpec((None, th, ph, W, pwE),
                               lambda b, hb: (b, hb, 0, 0, 0)),
        compiler_params=pltpu.CompilerParams(
            dimension_semantics=("parallel", "parallel"),                # both axes independent (megacore-friendly)
            vmem_limit_bytes=64 * 1024 * 1024),
    )(x3, w_mat, b_t, g_t, bt_t, ssum, sbc)

    # (B, H, ph, W, pw*E) -> (B, H*ph*W*pw, E): row-major order is exactly the
    # PyTorch token order, so this reshape is metadata-only (no HBM pass).
    H_out, W_out = H * ph, W * pw
    tokens = out5.reshape(B, H_out * W_out, E)
    return tokens, (H_out, W_out)


if __name__ == "__main__":
    key = jax.random.PRNGKey(0)
    B, C, Hin, Win = 2, 4, 16, 16        # small synthetic input (NCHW)
    patch = (2, 2)                       # patch_size
    E = 32                               # embed_dim

    k1, k2, k3, k4, k5 = jax.random.split(key, 5)
    x = jax.random.normal(k1, (B, C, Hin, Win), jnp.float32)
    # deterministic synthetic params (ConvTranspose2d weight layout: (in, out, kh, kw))
    weight = 0.1 * jax.random.normal(k2, (C, E, patch[0], patch[1]), jnp.float32)
    bias = 0.1 * jax.random.normal(k3, (E,), jnp.float32)
    gamma = 1.0 + 0.05 * jax.random.normal(k4, (E,), jnp.float32)
    beta = 0.05 * jax.random.normal(k5, (E,), jnp.float32)

    out, (Ho, Wo) = de_patch_embed(x, weight, bias, gamma, beta, patch)
    out = jax.block_until_ready(out)

    # pure-JAX reference (ConvTranspose2d with kernel==stride, then LayerNorm),
    # with the same bf16 quantization of the matmul inputs the kernel applies.
    xq = x.astype(jnp.bfloat16).astype(jnp.float32)
    wq = weight.astype(jnp.bfloat16).astype(jnp.float32)
    y_ref = jnp.einsum('bchw,cekl->bhwkle', xq, wq) + bias          # (B,H,W,ph,pw,E)
    y_ref = y_ref.transpose(0, 1, 3, 2, 4, 5).reshape(B, Ho * Wo, E)
    mean = y_ref.mean(-1, keepdims=True)
    var = ((y_ref - mean) ** 2).mean(-1, keepdims=True)
    ref = (y_ref - mean) / jnp.sqrt(var + LN_EPS) * gamma + beta

    assert out.shape == (B, Ho * Wo, E)
    assert (Ho, Wo) == (Hin * patch[0], Win * patch[1])
    err = float(jnp.max(jnp.abs(out - ref)))
    assert jnp.allclose(out, ref, atol=2e-3, rtol=2e-3), f"max abs err = {err}"
    print("KERNEL_OK")
</pallas_src>

<mosaic_0001>
module attributes {stable_mosaic.version = 11 : i64} {
  func.func @_fused_kernel(%arg0: i32, %arg1: i32, %arg2: memref<1x4x256xf32, #tpu.memory_space<vmem>>, %arg3: memref<4x128xbf16, #tpu.memory_space<vmem>>, %arg4: memref<1x128xf32, #tpu.memory_space<vmem>>, %arg5: memref<1x128xf32, #tpu.memory_space<vmem>>, %arg6: memref<1x128xf32, #tpu.memory_space<vmem>>, %arg7: memref<128x4xf32, #tpu.memory_space<vmem>>, %arg8: memref<4x128xf32, #tpu.memory_space<vmem>>, %arg9: memref<1x16x2x16x64xf32, #tpu.memory_space<vmem>>) attributes {dimension_semantics = [#tpu.dimension_semantics<parallel>, #tpu.dimension_semantics<parallel>], iteration_bounds = array<i64: 2, 1>, scalar_prefetch = 0 : i64, scratch_operands = 0 : i64, tpu.core_type = #tpu.core_type<tc>, window_params = [{transform_indices = @transform_0, window_bounds = array<i64: 1, 4, 256>}, {pipeline_mode = #tpu.pipeline_mode<synchronous>, transform_indices = @transform_1, window_bounds = array<i64: 4, 128>}, {pipeline_mode = #tpu.pipeline_mode<synchronous>, transform_indices = @transform_2, window_bounds = array<i64: 1, 128>}, {pipeline_mode = #tpu.pipeline_mode<synchronous>, transform_indices = @transform_3, window_bounds = array<i64: 1, 128>}, {pipeline_mode = #tpu.pipeline_mode<synchronous>, transform_indices = @transform_4, window_bounds = array<i64: 1, 128>}, {pipeline_mode = #tpu.pipeline_mode<synchronous>, transform_indices = @transform_5, window_bounds = array<i64: 128, 4>}, {pipeline_mode = #tpu.pipeline_mode<synchronous>, transform_indices = @transform_6, window_bounds = array<i64: 4, 128>}, {transform_indices = @transform_7, window_bounds = array<i64: 1, 16, 2, 16, 64>}]} {
    %c0 = arith.constant 0 : index
    %c0_0 = arith.constant 0 : index
    %c0_1 = arith.constant 0 : index
    %0 = vector.load %arg2[%c0, %c0_0, %c0_1] : memref<1x4x256xf32, #tpu.memory_space<vmem>>, vector<1x4x256xf32>
    %1 = vector.shape_cast %0 : vector<1x4x256xf32> to vector<4x256xf32>
    %2 = arith.truncf %1 : vector<4x256xf32> to vector<4x256xbf16>
    %c0_2 = arith.constant 0 : index
    %c0_3 = arith.constant 0 : index
    %3 = vector.load %arg3[%c0_2, %c0_3] : memref<4x128xbf16, #tpu.memory_space<vmem>>, vector<4x128xbf16>
    %cst = arith.constant dense<0.000000e+00> : vector<256x128xf32>
    %4 = tpu.matmul %2, %3, %cst {dimension_numbers = #tpu.dot_dimension_numbers<[0], [0], [1], [1], [0, 1, 1, 1], [], []>} : vector<4x256xbf16>, vector<4x128xbf16>, vector<256x128xf32> -> vector<256x128xf32>
    %c0_4 = arith.constant 0 : index
    %c0_5 = arith.constant 0 : index
    %5 = vector.load %arg4[%c0_4, %c0_5] : memref<1x128xf32, #tpu.memory_space<vmem>>, vector<1x128xf32>
    %6 = vector.broadcast %5 : vector<1x128xf32> to vector<256x128xf32>
    %7 = arith.addf %4, %6 : vector<256x128xf32>
    %c0_6 = arith.constant 0 : index
    %c0_7 = arith.constant 0 : index
    %8 = vector.load %arg7[%c0_6, %c0_7] : memref<128x4xf32, #tpu.memory_space<vmem>>, vector<128x4xf32>
    %c0_8 = arith.constant 0 : index
    %c0_9 = arith.constant 0 : index
    %9 = vector.load %arg8[%c0_8, %c0_9] : memref<4x128xf32, #tpu.memory_space<vmem>>, vector<4x128xf32>
    %cst_10 = arith.constant dense<0.000000e+00> : vector<256x4xf32>
    %10 = tpu.matmul %7, %8, %cst_10 {dimension_numbers = #tpu.dot_dimension_numbers<[1], [0], [0], [1], [0, 0, 1, 1], [], []>} : vector<256x128xf32>, vector<128x4xf32>, vector<256x4xf32> -> vector<256x4xf32>
    %cst_11 = arith.constant dense<0.000000e+00> : vector<256x128xf32>
    %11 = tpu.matmul %10, %9, %cst_11 {dimension_numbers = #tpu.dot_dimension_numbers<[1], [0], [0], [1], [0, 0, 1, 1], [], []>} : vector<256x4xf32>, vector<4x128xf32>, vector<256x128xf32> -> vector<256x128xf32>
    %12 = arith.subf %7, %11 : vector<256x128xf32>
    %13 = arith.mulf %12, %12 : vector<256x128xf32>
    %cst_12 = arith.constant dense<0.000000e+00> : vector<256x4xf32>
    %14 = tpu.matmul %13, %8, %cst_12 {dimension_numbers = #tpu.dot_dimension_numbers<[1], [0], [0], [1], [0, 0, 1, 1], [], []>} : vector<256x128xf32>, vector<128x4xf32>, vector<256x4xf32> -> vector<256x4xf32>
    %cst_13 = arith.constant dense<0.000000e+00> : vector<256x128xf32>
    %15 = tpu.matmul %14, %9, %cst_13 {dimension_numbers = #tpu.dot_dimension_numbers<[1], [0], [0], [1], [0, 0, 1, 1], [], []>} : vector<256x4xf32>, vector<4x128xf32>, vector<256x128xf32> -> vector<256x128xf32>
    %cst_14 = arith.constant 9.99999974E-6 : f32
    %16 = vector.broadcast %cst_14 : f32 to vector<256x128xf32>
    %17 = arith.addf %15, %16 : vector<256x128xf32>
    %18 = math.rsqrt %17 : vector<256x128xf32>
    %19 = arith.mulf %12, %18 : vector<256x128xf32>
    %c0_15 = arith.constant 0 : index
    %c0_16 = arith.constant 0 : index
    %20 = vector.load %arg5[%c0_15, %c0_16] : memref<1x128xf32, #tpu.memory_space<vmem>>, vector<1x128xf32>
    %21 = vector.broadcast %20 : vector<1x128xf32> to vector<256x128xf32>
    %22 = arith.mulf %19, %21 : vector<256x128xf32>
    %c0_17 = arith.constant 0 : index
    %c0_18 = arith.constant 0 : index
    %23 = vector.load %arg6[%c0_17, %c0_18] : memref<1x128xf32, #tpu.memory_space<vmem>>, vector<1x128xf32>
    %24 = vector.broadcast %23 : vector<1x128xf32> to vector<256x128xf32>
    %25 = arith.addf %22, %24 : vector<256x128xf32>
    %26 = vector.extract_strided_slice %25 {offsets = [0, 0], sizes = [16, 128], strides = [1, 1]} : vector<256x128xf32> to vector<16x128xf32>
    %27 = vector.extract_strided_slice %26 {offsets = [0, 0], sizes = [16, 64], strides = [1, 1]} : vector<16x128xf32> to vector<16x64xf32>
    %c0_19 = arith.constant 0 : index
    %c0_20 = arith.constant 0 : index
    %c0_21 = arith.constant 0 : index
    %c0_22 = arith.constant 0 : index
    %c0_23 = arith.constant 0 : index
    %28 = vector.load %arg9[%c0_19, %c0_20, %c0_21, %c0_22, %c0_23] : memref<1x16x2x16x64xf32, #tpu.memory_space<vmem>>, vector<1x1x1x16x64xf32>
    %29 = vector.shape_cast %28 : vector<1x1x1x16x64xf32> to vector<16x64xf32>
    %30 = vector.shape_cast %27 : vector<16x64xf32> to vector<1x1x1x16x64xf32>
    tpu.vector_store %arg9[%c0_19, %c0_20, %c0_21, %c0_22, %c0_23], %30 {strides = array<i32>} : memref<1x16x2x16x64xf32, #tpu.memory_space<vmem>>, vector<1x1x1x16x64xf32>,
    %31 = vector.extract_strided_slice %26 {offsets = [0, 64], sizes = [16, 64], strides = [1, 1]} : vector<16x128xf32> to vector<16x64xf32>
    %c0_24 = arith.constant 0 : index
    %c0_25 = arith.constant 0 : index
    %c1 = arith.constant 1 : index
    %c0_26 = arith.constant 0 : index
    %c0_27 = arith.constant 0 : index
    %32 = vector.load %arg9[%c0_24, %c0_25, %c1, %c0_26, %c0_27] : memref<1x16x2x16x64xf32, #tpu.memory_space<vmem>>, vector<1x1x1x16x64xf32>
    %33 = vector.shape_cast %32 : vector<1x1x1x16x64xf32> to vector<16x64xf32>
    %34 = vector.shape_cast %31 : vector<16x64xf32> to vector<1x1x1x16x64xf32>
    tpu.vector_store %arg9[%c0_24, %c0_25, %c1, %c0_26, %c0_27], %34 {strides = array<i32>} : memref<1x16x2x16x64xf32, #tpu.memory_space<vmem>>, vector<1x1x1x16x64xf32>,
    %35 = vector.extract_strided_slice %25 {offsets = [16, 0], sizes = [16, 128], strides = [1, 1]} : vector<256x128xf32> to vector<16x128xf32>
    %36 = vector.extract_strided_slice %35 {offsets = [0, 0], sizes = [16, 64], strides = [1, 1]} : vector<16x128xf32> to vector<16x64xf32>
    %c0_28 = arith.constant 0 : index
    %c1_29 = arith.constant 1 : index
    %c0_30 = arith.constant 0 : index
    %c0_31 = arith.constant 0 : index
    %c0_32 = arith.constant 0 : index
    %37 = vector.load %arg9[%c0_28, %c1_29, %c0_30, %c0_31, %c0_32] : memref<1x16x2x16x64xf32, #tpu.memory_space<vmem>>, vector<1x1x1x16x64xf32>
    %38 = vector.shape_cast %37 : vector<1x1x1x16x64xf32> to vector<16x64xf32>
    %39 = vector.shape_cast %36 : vector<16x64xf32> to vector<1x1x1x16x64xf32>
    tpu.vector_store %arg9[%c0_28, %c1_29, %c0_30, %c0_31, %c0_32], %39 {strides = array<i32>} : memref<1x16x2x16x64xf32, #tpu.memory_space<vmem>>, vector<1x1x1x16x64xf32>,
    %40 = vector.extract_strided_slice %35 {offsets = [0, 64], sizes = [16, 64], strides = [1, 1]} : vector<16x128xf32> to vector<16x64xf32>
    %c0_33 = arith.constant 0 : index
    %c1_34 = arith.constant 1 : index
    %c1_35 = arith.constant 1 : index
    %c0_36 = arith.constant 0 : index
    %c0_37 = arith.constant 0 : index
    %41 = vector.load %arg9[%c0_33, %c1_34, %c1_35, %c0_36, %c0_37] : memref<1x16x2x16x64xf32, #tpu.memory_space<vmem>>, vector<1x1x1x16x64xf32>
    %42 = vector.shape_cast %41 : vector<1x1x1x16x64xf32> to vector<16x64xf32>
    %43 = vector.shape_cast %40 : vector<16x64xf32> to vector<1x1x1x16x64xf32>
    tpu.vector_store %arg9[%c0_33, %c1_34, %c1_35, %c0_36, %c0_37], %43 {strides = array<i32>} : memref<1x16x2x16x64xf32, #tpu.memory_space<vmem>>, vector<1x1x1x16x64xf32>,
    %44 = vector.extract_strided_slice %25 {offsets = [32, 0], sizes = [16, 128], strides = [1, 1]} : vector<256x128xf32> to vector<16x128xf32>
    %45 = vector.extract_strided_slice %44 {offsets = [0, 0], sizes = [16, 64], strides = [1, 1]} : vector<16x128xf32> to vector<16x64xf32>
    %c0_38 = arith.constant 0 : index
    %c2 = arith.constant 2 : index
    %c0_39 = arith.constant 0 : index
    %c0_40 = arith.constant 0 : index
    %c0_41 = arith.constant 0 : index
    %46 = vector.load %arg9[%c0_38, %c2, %c0_39, %c0_40, %c0_41] : memref<1x16x2x16x64xf32, #tpu.memory_space<vmem>>, vector<1x1x1x16x64xf32>
    %47 = vector.shape_cast %46 : vector<1x1x1x16x64xf32> to vector<16x64xf32>
    %48 = vector.shape_cast %45 : vector<16x64xf32> to vector<1x1x1x16x64xf32>
    tpu.vector_store %arg9[%c0_38, %c2, %c0_39, %c0_40, %c0_41], %48 {strides = array<i32>} : memref<1x16x2x16x64xf32, #tpu.memory_space<vmem>>, vector<1x1x1x16x64xf32>,
    %49 = vector.extract_strided_slice %44 {offsets = [0, 64], sizes = [16, 64], strides = [1, 1]} : vector<16x128xf32> to vector<16x64xf32>
    %c0_42 = arith.constant 0 : index
    %c2_43 = arith.constant 2 : index
    %c1_44 = arith.constant 1 : index
    %c0_45 = arith.constant 0 : index
    %c0_46 = arith.constant 0 : index
    %50 = vector.load %arg9[%c0_42, %c2_43, %c1_44, %c0_45, %c0_46] : memref<1x16x2x16x64xf32, #tpu.memory_space<vmem>>, vector<1x1x1x16x64xf32>
    %51 = vector.shape_cast %50 : vector<1x1x1x16x64xf32> to vector<16x64xf32>
    %52 = vector.shape_cast %49 : vector<16x64xf32> to vector<1x1x1x16x64xf32>
    tpu.vector_store %arg9[%c0_42, %c2_43, %c1_44, %c0_45, %c0_46], %52 {strides = array<i32>} : memref<1x16x2x16x64xf32, #tpu.memory_space<vmem>>, vector<1x1x1x16x64xf32>,
    %53 = vector.extract_strided_slice %25 {offsets = [48, 0], sizes = [16, 128], strides = [1, 1]} : vector<256x128xf32> to vector<16x128xf32>
    %54 = vector.extract_strided_slice %53 {offsets = [0, 0], sizes = [16, 64], strides = [1, 1]} : vector<16x128xf32> to vector<16x64xf32>
    %c0_47 = arith.constant 0 : index
    %c3 = arith.constant 3 : index
    %c0_48 = arith.constant 0 : index
    %c0_49 = arith.constant 0 : index
    %c0_50 = arith.constant 0 : index
    %55 = vector.load %arg9[%c0_47, %c3, %c0_48, %c0_49, %c0_50] : memref<1x16x2x16x64xf32, #tpu.memory_space<vmem>>, vector<1x1x1x16x64xf32>
    %56 = vector.shape_cast %55 : vector<1x1x1x16x64xf32> to vector<16x64xf32>
    %57 = vector.shape_cast %54 : vector<16x64xf32> to vector<1x1x1x16x64xf32>
    tpu.vector_store %arg9[%c0_47, %c3, %c0_48, %c0_49, %c0_50], %57 {strides = array<i32>} : memref<1x16x2x16x64xf32, #tpu.memory_space<vmem>>, vector<1x1x1x16x64xf32>,
    %58 = vector.extract_strided_slice %53 {offsets = [0, 64], sizes = [16, 64], strides = [1, 1]} : vector<16x128xf32> to vector<16x64xf32>
    %c0_51 = arith.constant 0 : index
    %c3_52 = arith.constant 3 : index
    %c1_53 = arith.constant 1 : index
    %c0_54 = arith.constant 0 : index
    %c0_55 = arith.constant 0 : index
    %59 = vector.load %arg9[%c0_51, %c3_52, %c1_53, %c0_54, %c0_55] : memref<1x16x2x16x64xf32, #tpu.memory_space<vmem>>, vector<1x1x1x16x64xf32>
    %60 = vector.shape_cast %59 : vector<1x1x1x16x64xf32> to vector<16x64xf32>
    %61 = vector.shape_cast %58 : vector<16x64xf32> to vector<1x1x1x16x64xf32>
    tpu.vector_store %arg9[%c0_51, %c3_52, %c1_53, %c0_54, %c0_55], %61 {strides = array<i32>} : memref<1x16x2x16x64xf32, #tpu.memory_space<vmem>>, vector<1x1x1x16x64xf32>,
    %62 = vector.extract_strided_slice %25 {offsets = [64, 0], sizes = [16, 128], strides = [1, 1]} : vector<256x128xf32> to vector<16x128xf32>
    %63 = vector.extract_strided_slice %62 {offsets = [0, 0], sizes = [16, 64], strides = [1, 1]} : vector<16x128xf32> to vector<16x64xf32>
    %c0_56 = arith.constant 0 : index
    %c4 = arith.constant 4 : index
    %c0_57 = arith.constant 0 : index
    %c0_58 = arith.constant 0 : index
    %c0_59 = arith.constant 0 : index
    %64 = vector.load %arg9[%c0_56, %c4, %c0_57, %c0_58, %c0_59] : memref<1x16x2x16x64xf32, #tpu.memory_space<vmem>>, vector<1x1x1x16x64xf32>
    %65 = vector.shape_cast %64 : vector<1x1x1x16x64xf32> to vector<16x64xf32>
    %66 = vector.shape_cast %63 : vector<16x64xf32> to vector<1x1x1x16x64xf32>
    tpu.vector_store %arg9[%c0_56, %c4, %c0_57, %c0_58, %c0_59], %66 {strides = array<i32>} : memref<1x16x2x16x64xf32, #tpu.memory_space<vmem>>, vector<1x1x1x16x64xf32>,
    %67 = vector.extract_strided_slice %62 {offsets = [0, 64], sizes = [16, 64], strides = [1, 1]} : vector<16x128xf32> to vector<16x64xf32>
    %c0_60 = arith.constant 0 : index
    %c4_61 = arith.constant 4 : index
    %c1_62 = arith.constant 1 : index
    %c0_63 = arith.constant 0 : index
    %c0_64 = arith.constant 0 : index
    %68 = vector.load %arg9[%c0_60, %c4_61, %c1_62, %c0_63, %c0_64] : memref<1x16x2x16x64xf32, #tpu.memory_space<vmem>>, vector<1x1x1x16x64xf32>
    %69 = vector.shape_cast %68 : vector<1x1x1x16x64xf32> to vector<16x64xf32>
    %70 = vector.shape_cast %67 : vector<16x64xf32> to vector<1x1x1x16x64xf32>
    tpu.vector_store %arg9[%c0_60, %c4_61, %c1_62, %c0_63, %c0_64], %70 {strides = array<i32>} : memref<1x16x2x16x64xf32, #tpu.memory_space<vmem>>, vector<1x1x1x16x64xf32>,
    %71 = vector.extract_strided_slice %25 {offsets = [80, 0], sizes = [16, 128], strides = [1, 1]} : vector<256x128xf32> to vector<16x128xf32>
    %72 = vector.extract_strided_slice %71 {offsets = [0, 0], sizes = [16, 64], strides = [1, 1]} : vector<16x128xf32> to vector<16x64xf32>
    %c0_65 = arith.constant 0 : index
    %c5 = arith.constant 5 : index
    %c0_66 = arith.constant 0 : index
    %c0_67 = arith.constant 0 : index
    %c0_68 = arith.constant 0 : index
    %73 = vector.load %arg9[%c0_65, %c5, %c0_66, %c0_67, %c0_68] : memref<1x16x2x16x64xf32, #tpu.memory_space<vmem>>, vector<1x1x1x16x64xf32>
    %74 = vector.shape_cast %73 : vector<1x1x1x16x64xf32> to vector<16x64xf32>
    %75 = vector.shape_cast %72 : vector<16x64xf32> to vector<1x1x1x16x64xf32>
    tpu.vector_store %arg9[%c0_65, %c5, %c0_66, %c0_67, %c0_68], %75 {strides = array<i32>} : memref<1x16x2x16x64xf32, #tpu.memory_space<vmem>>, vector<1x1x1x16x64xf32>,
    %76 = vector.extract_strided_slice %71 {offsets = [0, 64], sizes = [16, 64], strides = [1, 1]} : vector<16x128xf32> to vector<16x64xf32>
    %c0_69 = arith.constant 0 : index
    %c5_70 = arith.constant 5 : index
    %c1_71 = arith.constant 1 : index
    %c0_72 = arith.constant 0 : index
    %c0_73 = arith.constant 0 : index
    %77 = vector.load %arg9[%c0_69, %c5_70, %c1_71, %c0_72, %c0_73] : memref<1x16x2x16x64xf32, #tpu.memory_space<vmem>>, vector<1x1x1x16x64xf32>
    %78 = vector.shape_cast %77 : vector<1x1x1x16x64xf32> to vector<16x64xf32>
    %79 = vector.shape_cast %76 : vector<16x64xf32> to vector<1x1x1x16x64xf32>
    tpu.vector_store %arg9[%c0_69, %c5_70, %c1_71, %c0_72, %c0_73], %79 {strides = array<i32>} : memref<1x16x2x16x64xf32, #tpu.memory_space<vmem>>, vector<1x1x1x16x64xf32>,
    %80 = vector.extract_strided_slice %25 {offsets = [96, 0], sizes = [16, 128], strides = [1, 1]} : vector<256x128xf32> to vector<16x128xf32>
    %81 = vector.extract_strided_slice %80 {offsets = [0, 0], sizes = [16, 64], strides = [1, 1]} : vector<16x128xf32> to vector<16x64xf32>
    %c0_74 = arith.constant 0 : index
    %c6 = arith.constant 6 : index
    %c0_75 = arith.constant 0 : index
    %c0_76 = arith.constant 0 : index
    %c0_77 = arith.constant 0 : index
    %82 = vector.load %arg9[%c0_74, %c6, %c0_75, %c0_76, %c0_77] : memref<1x16x2x16x64xf32, #tpu.memory_space<vmem>>, vector<1x1x1x16x64xf32>
    %83 = vector.shape_cast %82 : vector<1x1x1x16x64xf32> to vector<16x64xf32>
    %84 = vector.shape_cast %81 : vector<16x64xf32> to vector<1x1x1x16x64xf32>
    tpu.vector_store %arg9[%c0_74, %c6, %c0_75, %c0_76, %c0_77], %84 {strides = array<i32>} : memref<1x16x2x16x64xf32, #tpu.memory_space<vmem>>, vector<1x1x1x16x64xf32>,
    %85 = vector.extract_strided_slice %80 {offsets = [0, 64], sizes = [16, 64], strides = [1, 1]} : vector<16x128xf32> to vector<16x64xf32>
    %c0_78 = arith.constant 0 : index
    %c6_79 = arith.constant 6 : index
    %c1_80 = arith.constant 1 : index
    %c0_81 = arith.constant 0 : index
    %c0_82 = arith.constant 0 : index
    %86 = vector.load %arg9[%c0_78, %c6_79, %c1_80, %c0_81, %c0_82] : memref<1x16x2x16x64xf32, #tpu.memory_space<vmem>>, vector<1x1x1x16x64xf32>
    %87 = vector.shape_cast %86 : vector<1x1x1x16x64xf32> to vector<16x64xf32>
    %88 = vector.shape_cast %85 : vector<16x64xf32> to vector<1x1x1x16x64xf32>
    tpu.vector_store %arg9[%c0_78, %c6_79, %c1_80, %c0_81, %c0_82], %88 {strides = array<i32>} : memref<1x16x2x16x64xf32, #tpu.memory_space<vmem>>, vector<1x1x1x16x64xf32>,
    %89 = vector.extract_strided_slice %25 {offsets = [112, 0], sizes = [16, 128], strides = [1, 1]} : vector<256x128xf32> to vector<16x128xf32>
    %90 = vector.extract_strided_slice %89 {offsets = [0, 0], sizes = [16, 64], strides = [1, 1]} : vector<16x128xf32> to vector<16x64xf32>
    %c0_83 = arith.constant 0 : index
    %c7 = arith.constant 7 : index
    %c0_84 = arith.constant 0 : index
    %c0_85 = arith.constant 0 : index
    %c0_86 = arith.constant 0 : index
    %91 = vector.load %arg9[%c0_83, %c7, %c0_84, %c0_85, %c0_86] : memref<1x16x2x16x64xf32, #tpu.memory_space<vmem>>, vector<1x1x1x16x64xf32>
    %92 = vector.shape_cast %91 : vector<1x1x1x16x64xf32> to vector<16x64xf32>
    %93 = vector.shape_cast %90 : vector<16x64xf32> to vector<1x1x1x16x64xf32>
    tpu.vector_store %arg9[%c0_83, %c7, %c0_84, %c0_85, %c0_86], %93 {strides = array<i32>} : memref<1x16x2x16x64xf32, #tpu.memory_space<vmem>>, vector<1x1x1x16x64xf32>,
    %94 = vector.extract_strided_slice %89 {offsets = [0, 64], sizes = [16, 64], strides = [1, 1]} : vector<16x128xf32> to vector<16x64xf32>
    %c0_87 = arith.constant 0 : index
    %c7_88 = arith.constant 7 : index
    %c1_89 = arith.constant 1 : index
    %c0_90 = arith.constant 0 : index
    %c0_91 = arith.constant 0 : index
    %95 = vector.load %arg9[%c0_87, %c7_88, %c1_89, %c0_90, %c0_91] : memref<1x16x2x16x64xf32, #tpu.memory_space<vmem>>, vector<1x1x1x16x64xf32>
    %96 = vector.shape_cast %95 : vector<1x1x1x16x64xf32> to vector<16x64xf32>
    %97 = vector.shape_cast %94 : vector<16x64xf32> to vector<1x1x1x16x64xf32>
    tpu.vector_store %arg9[%c0_87, %c7_88, %c1_89, %c0_90, %c0_91], %97 {strides = array<i32>} : memref<1x16x2x16x64xf32, #tpu.memory_space<vmem>>, vector<1x1x1x16x64xf32>,
    %98 = vector.extract_strided_slice %25 {offsets = [128, 0], sizes = [16, 128], strides = [1, 1]} : vector<256x128xf32> to vector<16x128xf32>
    %99 = vector.extract_strided_slice %98 {offsets = [0, 0], sizes = [16, 64], strides = [1, 1]} : vector<16x128xf32> to vector<16x64xf32>
    %c0_92 = arith.constant 0 : index
    %c8 = arith.constant 8 : index
    %c0_93 = arith.constant 0 : index
    %c0_94 = arith.constant 0 : index
    %c0_95 = arith.constant 0 : index
    %100 = vector.load %arg9[%c0_92, %c8, %c0_93, %c0_94, %c0_95] : memref<1x16x2x16x64xf32, #tpu.memory_space<vmem>>, vector<1x1x1x16x64xf32>
    %101 = vector.shape_cast %100 : vector<1x1x1x16x64xf32> to vector<16x64xf32>
    %102 = vector.shape_cast %99 : vector<16x64xf32> to vector<1x1x1x16x64xf32>
    tpu.vector_store %arg9[%c0_92, %c8, %c0_93, %c0_94, %c0_95], %102 {strides = array<i32>} : memref<1x16x2x16x64xf32, #tpu.memory_space<vmem>>, vector<1x1x1x16x64xf32>,
    %103 = vector.extract_strided_slice %98 {offsets = [0, 64], sizes = [16, 64], strides = [1, 1]} : vector<16x128xf32> to vector<16x64xf32>
    %c0_96 = arith.constant 0 : index
    %c8_97 = arith.constant 8 : index
    %c1_98 = arith.constant 1 : index
    %c0_99 = arith.constant 0 : index
    %c0_100 = arith.constant 0 : index
    %104 = vector.load %arg9[%c0_96, %c8_97, %c1_98, %c0_99, %c0_100] : memref<1x16x2x16x64xf32, #tpu.memory_space<vmem>>, vector<1x1x1x16x64xf32>
    %105 = vector.shape_cast %104 : vector<1x1x1x16x64xf32> to vector<16x64xf32>
    %106 = vector.shape_cast %103 : vector<16x64xf32> to vector<1x1x1x16x64xf32>
    tpu.vector_store %arg9[%c0_96, %c8_97, %c1_98, %c0_99, %c0_100], %106 {strides = array<i32>} : memref<1x16x2x16x64xf32, #tpu.memory_space<vmem>>, vector<1x1x1x16x64xf32>,
    %107 = vector.extract_strided_slice %25 {offsets = [144, 0], sizes = [16, 128], strides = [1, 1]} : vector<256x128xf32> to vector<16x128xf32>
    %108 = vector.extract_strided_slice %107 {offsets = [0, 0], sizes = [16, 64], strides = [1, 1]} : vector<16x128xf32> to vector<16x64xf32>
    %c0_101 = arith.constant 0 : index
    %c9 = arith.constant 9 : index
    %c0_102 = arith.constant 0 : index
    %c0_103 = arith.constant 0 : index
    %c0_104 = arith.constant 0 : index
    %109 = vector.load %arg9[%c0_101, %c9, %c0_102, %c0_103, %c0_104] : memref<1x16x2x16x64xf32, #tpu.memory_space<vmem>>, vector<1x1x1x16x64xf32>
    %110 = vector.shape_cast %109 : vector<1x1x1x16x64xf32> to vector<16x64xf32>
    %111 = vector.shape_cast %108 : vector<16x64xf32> to vector<1x1x1x16x64xf32>
    tpu.vector_store %arg9[%c0_101, %c9, %c0_102, %c0_103, %c0_104], %111 {strides = array<i32>} : memref<1x16x2x16x64xf32, #tpu.memory_space<vmem>>, vector<1x1x1x16x64xf32>,
    %112 = vector.extract_strided_slice %107 {offsets = [0, 64], sizes = [16, 64], strides = [1, 1]} : vector<16x128xf32> to vector<16x64xf32>
    %c0_105 = arith.constant 0 : index
    %c9_106 = arith.constant 9 : index
    %c1_107 = arith.constant 1 : index
    %c0_108 = arith.constant 0 : index
    %c0_109 = arith.constant 0 : index
    %113 = vector.load %arg9[%c0_105, %c9_106, %c1_107, %c0_108, %c0_109] : memref<1x16x2x16x64xf32, #tpu.memory_space<vmem>>, vector<1x1x1x16x64xf32>
    %114 = vector.shape_cast %113 : vector<1x1x1x16x64xf32> to vector<16x64xf32>
    %115 = vector.shape_cast %112 : vector<16x64xf32> to vector<1x1x1x16x64xf32>
    tpu.vector_store %arg9[%c0_105, %c9_106, %c1_107, %c0_108, %c0_109], %115 {strides = array<i32>} : memref<1x16x2x16x64xf32, #tpu.memory_space<vmem>>, vector<1x1x1x16x64xf32>,
    %116 = vector.extract_strided_slice %25 {offsets = [160, 0], sizes = [16, 128], strides = [1, 1]} : vector<256x128xf32> to vector<16x128xf32>
    %117 = vector.extract_strided_slice %116 {offsets = [0, 0], sizes = [16, 64], strides = [1, 1]} : vector<16x128xf32> to vector<16x64xf32>
    %c0_110 = arith.constant 0 : index
    %c10 = arith.constant 10 : index
    %c0_111 = arith.constant 0 : index
    %c0_112 = arith.constant 0 : index
    %c0_113 = arith.constant 0 : index
    %118 = vector.load %arg9[%c0_110, %c10, %c0_111, %c0_112, %c0_113] : memref<1x16x2x16x64xf32, #tpu.memory_space<vmem>>, vector<1x1x1x16x64xf32>
    %119 = vector.shape_cast %118 : vector<1x1x1x16x64xf32> to vector<16x64xf32>
    %120 = vector.shape_cast %117 : vector<16x64xf32> to vector<1x1x1x16x64xf32>
    tpu.vector_store %arg9[%c0_110, %c10, %c0_111, %c0_112, %c0_113], %120 {strides = array<i32>} : memref<1x16x2x16x64xf32, #tpu.memory_space<vmem>>, vector<1x1x1x16x64xf32>,
    %121 = vector.extract_strided_slice %116 {offsets = [0, 64], sizes = [16, 64], strides = [1, 1]} : vector<16x128xf32> to vector<16x64xf32>
    %c0_114 = arith.constant 0 : index
    %c10_115 = arith.constant 10 : index
    %c1_116 = arith.constant 1 : index
    %c0_117 = arith.constant 0 : index
    %c0_118 = arith.constant 0 : index
    %122 = vector.load %arg9[%c0_114, %c10_115, %c1_116, %c0_117, %c0_118] : memref<1x16x2x16x64xf32, #tpu.memory_space<vmem>>, vector<1x1x1x16x64xf32>
    %123 = vector.shape_cast %122 : vector<1x1x1x16x64xf32> to vector<16x64xf32>
    %124 = vector.shape_cast %121 : vector<16x64xf32> to vector<1x1x1x16x64xf32>
    tpu.vector_store %arg9[%c0_114, %c10_115, %c1_116, %c0_117, %c0_118], %124 {strides = array<i32>} : memref<1x16x2x16x64xf32, #tpu.memory_space<vmem>>, vector<1x1x1x16x64xf32>,
    %125 = vector.extract_strided_slice %25 {offsets = [176, 0], sizes = [16, 128], strides = [1, 1]} : vector<256x128xf32> to vector<16x128xf32>
    %126 = vector.extract_strided_slice %125 {offsets = [0, 0], sizes = [16, 64], strides = [1, 1]} : vector<16x128xf32> to vector<16x64xf32>
    %c0_119 = arith.constant 0 : index
    %c11 = arith.constant 11 : index
    %c0_120 = arith.constant 0 : index
    %c0_121 = arith.constant 0 : index
    %c0_122 = arith.constant 0 : index
    %127 = vector.load %arg9[%c0_119, %c11, %c0_120, %c0_121, %c0_122] : memref<1x16x2x16x64xf32, #tpu.memory_space<vmem>>, vector<1x1x1x16x64xf32>
    %128 = vector.shape_cast %127 : vector<1x1x1x16x64xf32> to vector<16x64xf32>
    %129 = vector.shape_cast %126 : vector<16x64xf32> to vector<1x1x1x16x64xf32>
    tpu.vector_store %arg9[%c0_119, %c11, %c0_120, %c0_121, %c0_122], %129 {strides = array<i32>} : memref<1x16x2x16x64xf32, #tpu.memory_space<vmem>>, vector<1x1x1x16x64xf32>,
    %130 = vector.extract_strided_slice %125 {offsets = [0, 64], sizes = [16, 64], strides = [1, 1]} : vector<16x128xf32> to vector<16x64xf32>
    %c0_123 = arith.constant 0 : index
    %c11_124 = arith.constant 11 : index
    %c1_125 = arith.constant 1 : index
    %c0_126 = arith.constant 0 : index
    %c0_127 = arith.constant 0 : index
    %131 = vector.load %arg9[%c0_123, %c11_124, %c1_125, %c0_126, %c0_127] : memref<1x16x2x16x64xf32, #tpu.memory_space<vmem>>, vector<1x1x1x16x64xf32>
    %132 = vector.shape_cast %131 : vector<1x1x1x16x64xf32> to vector<16x64xf32>
    %133 = vector.shape_cast %130 : vector<16x64xf32> to vector<1x1x1x16x64xf32>
    tpu.vector_store %arg9[%c0_123, %c11_124, %c1_125, %c0_126, %c0_127], %133 {strides = array<i32>} : memref<1x16x2x16x64xf32, #tpu.memory_space<vmem>>, vector<1x1x1x16x64xf32>,
    %134 = vector.extract_strided_slice %25 {offsets = [192, 0], sizes = [16, 128], strides = [1, 1]} : vector<256x128xf32> to vector<16x128xf32>
    %135 = vector.extract_strided_slice %134 {offsets = [0, 0], sizes = [16, 64], strides = [1, 1]} : vector<16x128xf32> to vector<16x64xf32>
    %c0_128 = arith.constant 0 : index
    %c12 = arith.constant 12 : index
    %c0_129 = arith.constant 0 : index
    %c0_130 = arith.constant 0 : index
    %c0_131 = arith.constant 0 : index
    %136 = vector.load %arg9[%c0_128, %c12, %c0_129, %c0_130, %c0_131] : memref<1x16x2x16x64xf32, #tpu.memory_space<vmem>>, vector<1x1x1x16x64xf32>
    %137 = vector.shape_cast %136 : vector<1x1x1x16x64xf32> to vector<16x64xf32>
    %138 = vector.shape_cast %135 : vector<16x64xf32> to vector<1x1x1x16x64xf32>
    tpu.vector_store %arg9[%c0_128, %c12, %c0_129, %c0_130, %c0_131], %138 {strides = array<i32>} : memref<1x16x2x16x64xf32, #tpu.memory_space<vmem>>, vector<1x1x1x16x64xf32>,
    %139 = vector.extract_strided_slice %134 {offsets = [0, 64], sizes = [16, 64], strides = [1, 1]} : vector<16x128xf32> to vector<16x64xf32>
    %c0_132 = arith.constant 0 : index
    %c12_133 = arith.constant 12 : index
    %c1_134 = arith.constant 1 : index
    %c0_135 = arith.constant 0 : index
    %c0_136 = arith.constant 0 : index
    %140 = vector.load %arg9[%c0_132, %c12_133, %c1_134, %c0_135, %c0_136] : memref<1x16x2x16x64xf32, #tpu.memory_space<vmem>>, vector<1x1x1x16x64xf32>
    %141 = vector.shape_cast %140 : vector<1x1x1x16x64xf32> to vector<16x64xf32>
    %142 = vector.shape_cast %139 : vector<16x64xf32> to vector<1x1x1x16x64xf32>
    tpu.vector_store %arg9[%c0_132, %c12_133, %c1_134, %c0_135, %c0_136], %142 {strides = array<i32>} : memref<1x16x2x16x64xf32, #tpu.memory_space<vmem>>, vector<1x1x1x16x64xf32>,
    %143 = vector.extract_strided_slice %25 {offsets = [208, 0], sizes = [16, 128], strides = [1, 1]} : vector<256x128xf32> to vector<16x128xf32>
    %144 = vector.extract_strided_slice %143 {offsets = [0, 0], sizes = [16, 64], strides = [1, 1]} : vector<16x128xf32> to vector<16x64xf32>
    %c0_137 = arith.constant 0 : index
    %c13 = arith.constant 13 : index
    %c0_138 = arith.constant 0 : index
    %c0_139 = arith.constant 0 : index
    %c0_140 = arith.constant 0 : index
    %145 = vector.load %arg9[%c0_137, %c13, %c0_138, %c0_139, %c0_140] : memref<1x16x2x16x64xf32, #tpu.memory_space<vmem>>, vector<1x1x1x16x64xf32>
    %146 = vector.shape_cast %145 : vector<1x1x1x16x64xf32> to vector<16x64xf32>
    %147 = vector.shape_cast %144 : vector<16x64xf32> to vector<1x1x1x16x64xf32>
    tpu.vector_store %arg9[%c0_137, %c13, %c0_138, %c0_139, %c0_140], %147 {strides = array<i32>} : memref<1x16x2x16x64xf32, #tpu.memory_space<vmem>>, vector<1x1x1x16x64xf32>,
    %148 = vector.extract_strided_slice %143 {offsets = [0, 64], sizes = [16, 64], strides = [1, 1]} : vector<16x128xf32> to vector<16x64xf32>
    %c0_141 = arith.constant 0 : index
    %c13_142 = arith.constant 13 : index
    %c1_143 = arith.constant 1 : index
    %c0_144 = arith.constant 0 : index
    %c0_145 = arith.constant 0 : index
    %149 = vector.load %arg9[%c0_141, %c13_142, %c1_143, %c0_144, %c0_145] : memref<1x16x2x16x64xf32, #tpu.memory_space<vmem>>, vector<1x1x1x16x64xf32>
    %150 = vector.shape_cast %149 : vector<1x1x1x16x64xf32> to vector<16x64xf32>
    %151 = vector.shape_cast %148 : vector<16x64xf32> to vector<1x1x1x16x64xf32>
    tpu.vector_store %arg9[%c0_141, %c13_142, %c1_143, %c0_144, %c0_145], %151 {strides = array<i32>} : memref<1x16x2x16x64xf32, #tpu.memory_space<vmem>>, vector<1x1x1x16x64xf32>,
    %152 = vector.extract_strided_slice %25 {offsets = [224, 0], sizes = [16, 128], strides = [1, 1]} : vector<256x128xf32> to vector<16x128xf32>
    %153 = vector.extract_strided_slice %152 {offsets = [0, 0], sizes = [16, 64], strides = [1, 1]} : vector<16x128xf32> to vector<16x64xf32>
    %c0_146 = arith.constant 0 : index
    %c14 = arith.constant 14 : index
    %c0_147 = arith.constant 0 : index
    %c0_148 = arith.constant 0 : index
    %c0_149 = arith.constant 0 : index
    %154 = vector.load %arg9[%c0_146, %c14, %c0_147, %c0_148, %c0_149] : memref<1x16x2x16x64xf32, #tpu.memory_space<vmem>>, vector<1x1x1x16x64xf32>
    %155 = vector.shape_cast %154 : vector<1x1x1x16x64xf32> to vector<16x64xf32>
    %156 = vector.shape_cast %153 : vector<16x64xf32> to vector<1x1x1x16x64xf32>
    tpu.vector_store %arg9[%c0_146, %c14, %c0_147, %c0_148, %c0_149], %156 {strides = array<i32>} : memref<1x16x2x16x64xf32, #tpu.memory_space<vmem>>, vector<1x1x1x16x64xf32>,
    %157 = vector.extract_strided_slice %152 {offsets = [0, 64], sizes = [16, 64], strides = [1, 1]} : vector<16x128xf32> to vector<16x64xf32>
    %c0_150 = arith.constant 0 : index
    %c14_151 = arith.constant 14 : index
    %c1_152 = arith.constant 1 : index
    %c0_153 = arith.constant 0 : index
    %c0_154 = arith.constant 0 : index
    %158 = vector.load %arg9[%c0_150, %c14_151, %c1_152, %c0_153, %c0_154] : memref<1x16x2x16x64xf32, #tpu.memory_space<vmem>>, vector<1x1x1x16x64xf32>
    %159 = vector.shape_cast %158 : vector<1x1x1x16x64xf32> to vector<16x64xf32>
    %160 = vector.shape_cast %157 : vector<16x64xf32> to vector<1x1x1x16x64xf32>
    tpu.vector_store %arg9[%c0_150, %c14_151, %c1_152, %c0_153, %c0_154], %160 {strides = array<i32>} : memref<1x16x2x16x64xf32, #tpu.memory_space<vmem>>, vector<1x1x1x16x64xf32>,
    %161 = vector.extract_strided_slice %25 {offsets = [240, 0], sizes = [16, 128], strides = [1, 1]} : vector<256x128xf32> to vector<16x128xf32>
    %162 = vector.extract_strided_slice %161 {offsets = [0, 0], sizes = [16, 64], strides = [1, 1]} : vector<16x128xf32> to vector<16x64xf32>
    %c0_155 = arith.constant 0 : index
    %c15 = arith.constant 15 : index
    %c0_156 = arith.constant 0 : index
    %c0_157 = arith.constant 0 : index
    %c0_158 = arith.constant 0 : index
    %163 = vector.load %arg9[%c0_155, %c15, %c0_156, %c0_157, %c0_158] : memref<1x16x2x16x64xf32, #tpu.memory_space<vmem>>, vector<1x1x1x16x64xf32>
    %164 = vector.shape_cast %163 : vector<1x1x1x16x64xf32> to vector<16x64xf32>
    %165 = vector.shape_cast %162 : vector<16x64xf32> to vector<1x1x1x16x64xf32>
    tpu.vector_store %arg9[%c0_155, %c15, %c0_156, %c0_157, %c0_158], %165 {strides = array<i32>} : memref<1x16x2x16x64xf32, #tpu.memory_space<vmem>>, vector<1x1x1x16x64xf32>,
    %166 = vector.extract_strided_slice %161 {offsets = [0, 64], sizes = [16, 64], strides = [1, 1]} : vector<16x128xf32> to vector<16x64xf32>
    %c0_159 = arith.constant 0 : index
    %c15_160 = arith.constant 15 : index
    %c1_161 = arith.constant 1 : index
    %c0_162 = arith.constant 0 : index
    %c0_163 = arith.constant 0 : index
    %167 = vector.load %arg9[%c0_159, %c15_160, %c1_161, %c0_162, %c0_163] : memref<1x16x2x16x64xf32, #tpu.memory_space<vmem>>, vector<1x1x1x16x64xf32>
    %168 = vector.shape_cast %167 : vector<1x1x1x16x64xf32> to vector<16x64xf32>
    %169 = vector.shape_cast %166 : vector<16x64xf32> to vector<1x1x1x16x64xf32>
    tpu.vector_store %arg9[%c0_159, %c15_160, %c1_161, %c0_162, %c0_163], %169 {strides = array<i32>} : memref<1x16x2x16x64xf32, #tpu.memory_space<vmem>>, vector<1x1x1x16x64xf32>,
    return
  }
  func.func @transform_0(%arg0: i32, %arg1: i32) -> (i32, i32, i32) {
    %c0_i32 = arith.constant 0 : i32
    %c0_i32_0 = arith.constant 0 : i32
    return %arg0, %c0_i32, %arg1 : i32, i32, i32
  }
  func.func @transform_1(%arg0: i32, %arg1: i32) -> (i32, i32) {
    %c0_i32 = arith.constant 0 : i32
    %c0_i32_0 = arith.constant 0 : i32
    %c0_i32_1 = arith.constant 0 : i32
    return %c0_i32, %c0_i32_0 : i32, i32
  }
  func.func @transform_2(%arg0: i32, %arg1: i32) -> (i32, i32) {
    %c0_i32 = arith.constant 0 : i32
    %c0_i32_0 = arith.constant 0 : i32
    %c0_i32_1 = arith.constant 0 : i32
    return %c0_i32, %c0_i32_0 : i32, i32
  }
  func.func @transform_3(%arg0: i32, %arg1: i32) -> (i32, i32) {
    %c0_i32 = arith.constant 0 : i32
    %c0_i32_0 = arith.constant 0 : i32
    %c0_i32_1 = arith.constant 0 : i32
    return %c0_i32, %c0_i32_0 : i32, i32
  }
  func.func @transform_4(%arg0: i32, %arg1: i32) -> (i32, i32) {
    %c0_i32 = arith.constant 0 : i32
    %c0_i32_0 = arith.constant 0 : i32
    %c0_i32_1 = arith.constant 0 : i32
    return %c0_i32, %c0_i32_0 : i32, i32
  }
  func.func @transform_5(%arg0: i32, %arg1: i32) -> (i32, i32) {
    %c0_i32 = arith.constant 0 : i32
    %c0_i32_0 = arith.constant 0 : i32
    %c0_i32_1 = arith.constant 0 : i32
    return %c0_i32, %c0_i32_0 : i32, i32
  }
  func.func @transform_6(%arg0: i32, %arg1: i32) -> (i32, i32) {
    %c0_i32 = arith.constant 0 : i32
    %c0_i32_0 = arith.constant 0 : i32
    %c0_i32_1 = arith.constant 0 : i32
    return %c0_i32, %c0_i32_0 : i32, i32
  }
  func.func @transform_7(%arg0: i32, %arg1: i32) -> (i32, i32, i32, i32, i32) {
    %c0_i32 = arith.constant 0 : i32
    %c0_i32_0 = arith.constant 0 : i32
    %c0_i32_1 = arith.constant 0 : i32
    %c0_i32_2 = arith.constant 0 : i32
    return %arg0, %arg1, %c0_i32, %c0_i32_0, %c0_i32_1 : i32, i32, i32, i32, i32
  }
}

</mosaic_0001>

<llo_original>
// kernel: tpu_custom_call.1
$region0: #{tpu_custom_call.1}
  #allocation0 [shape = 'u32[]', space=smem, size = 0x4, offset = 0x4, fixed_abs, tag = 'smem constant byte address 0x4 - core index']
  #allocation1 [shape = 'u32[144,128]{1,0:T(1,128)}', space=vmem, size = 0x12000, scoped, tag = 'internal scratch']
  %s0 = inlined_call_operand.hbm [shape: f32[2,4,256], index: 0, kind: input, shape index: {}]
  %s1 = inlined_call_operand.hbm [shape: bf16[4,128], index: 1, kind: input, shape index: {}]
  %s2 = inlined_call_operand.hbm [shape: f32[1,128], index: 2, kind: input, shape index: {}]
  %s3 = inlined_call_operand.hbm [shape: f32[1,128], index: 3, kind: input, shape index: {}]
  %s4 = inlined_call_operand.hbm [shape: f32[1,128], index: 4, kind: input, shape index: {}]
  %s5 = inlined_call_operand.hbm [shape: f32[128,4], index: 5, kind: input, shape index: {}]
  %s6 = inlined_call_operand.hbm [shape: f32[4,128], index: 6, kind: input, shape index: {}]
  %s7 = inlined_call_operand.hbm [shape: f32[2,16,2,16,64], index: 7, kind: output, shape index: {}]
  %s8 = sld [smem:[#allocation0]]
  $region89: #{tpu_custom_call.1} parent=0
    _
  %s10 = ssub.s32 1, %s8
  %s11 = scalar_select 0, %s10, %s8
  $region1: #{tpu_custom_call.1} parent=0
    #allocation2 [shape = 'u8[8192]{0}', space=vmem, size = 0x2000, scoped, tag = 'input window, operand 0']
    #allocation3 [shape = 's32[2]{0}', space=sflag, size = 0x8, scoped, tag = 'scoped memory for tpu_custom_call.1']
    #allocation4 [shape = 's32[2]{0}', space=sflag, size = 0x8, scoped, tag = 'scoped memory for tpu_custom_call.1']
    #allocation5 [shape = 'u8[1024]{0}', space=vmem, size = 0x400, scoped, tag = 'input window, operand 1, single buffered']
    #allocation6 [shape = 's32[1]{0}', space=sflag, size = 0x4, scoped, tag = 'scoped memory for tpu_custom_call.1']
    #allocation7 [shape = 'u8[512]{0}', space=vmem, size = 0x400, scoped, tag = 'input window, operand 2, single buffered']
    #allocation8 [shape = 'u8[512]{0}', space=vmem, size = 0x400, scoped, tag = 'input window, operand 3, single buffered']
    #allocation9 [shape = 's32[1]{0}', space=sflag, size = 0x4, scoped, tag = 'scoped memory for tpu_custom_call.1']
    #allocation10 [shape = 'u8[512]{0}', space=vmem, size = 0x400, scoped, tag = 'input window, operand 4, single buffered']
    #allocation11 [shape = 'u8[65536]{0}', space=vmem, size = 0x10000, scoped, tag = 'input window, operand 5, single buffered']
    #allocation12 [shape = 's32[1]{0}', space=sflag, size = 0x4, scoped, tag = 'scoped memory for tpu_custom_call.1']
    #allocation13 [shape = 'u8[2048]{0}', space=vmem, size = 0x800, scoped, tag = 'input window, operand 6, single buffered']
    #allocation14 [shape = 'u8[524288]{0}', space=vmem, size = 0x80000, scoped, tag = 'output window, operand 0']
    %12 = vsyncpa [#allocation3], 0
    %s13 = scalar_lea.sflag [#allocation3], 1
    %14 = vsyncpa %s13, 0
    %15 = vsyncpa [#allocation6], 0
    %16 = vsyncpa [#allocation9], 0
    %17 = vsyncpa [#allocation12], 0
    %18 = vsyncpa [#allocation4], 0
    %s19 = scalar_lea.sflag [#allocation4], 1
    %20 = vsyncpa %s19, 0
    loop: start=0, step=1, limit=4
    $region2: #{tpu_custom_call.1} parent=1 // loop_pre_header
      _
    $region3: #{tpu_custom_call.1} parent=1 // loop_header
      %s22 = sphi 0, %s26
      %p23 = scmp.ge.s32.totalorder %s22, 4
      %s29 = sphi 0, %s41
      %s30 = sphi 0, %s37
      %s31 = sphi 0, %s29
      %s32 = sphi 0, %s30
      %s33 = sphi 0, %s31
      %s34 = sphi 0, %s32
      %s46 = sphi 0, %s48
      %s49 = sphi 0, %s46
      %s50 = sphi 0, %s49
      %s66 = sphi 0, %s50
      %s70 = sphi 0, %s70
      %s72 = sphi 0, %s70
      %s73 = sphi 0, %s72
      %s87 = sphi 0, %s73
      %s91 = sphi 0, %s91
      %s93 = sphi 0, %s91
      %s94 = sphi 0, %s93
      %s108 = sphi 0, %s94
      %s112 = sphi 0, %s112
      %s114 = sphi 0, %s112
      %s115 = sphi 0, %s114
      %s129 = sphi 0, %s115
      %s133 = sphi 0, %s133
      %s135 = sphi 0, %s133
      %s136 = sphi 0, %s135
      %s150 = sphi 0, %s136
      %s154 = sphi 0, %s154
      %s156 = sphi 0, %s154
      %s157 = sphi 0, %s156
      %s171 = sphi 0, %s157
      %s175 = sphi 0, %s175
      %s177 = sphi 0, %s175
      %s178 = sphi 0, %s177
      %s192 = sphi 0, %s178
      %s200 = sphi 0, %s202
      %s203 = sphi 0, %s200
      %s204 = sphi 0, %s203
      %s220 = sphi 0, %s204
    $region4: #{tpu_custom_call.1} parent=1 // loop_header_branch
      %25 = sbr.rel (%p23) target = $region8
    $region5: #{tpu_custom_call.1} parent=1 // loop_body
      %s27 = ssub.s32 %s22, 1
      %s28 = ssub.s32 %s22, 2
      %s35 = sadd.s32 1, %s30
      %p36 = scmp.ge.s32.totalorder %s35, 1
      %s37 = scalar_select %p36, 0, %s35
      %s38 = sadd.s32 1, %s29
      %s39 = scalar_select %p36, %s38, %s29
      %p40 = scmp.ge.s32.totalorder %s39, 2
      %s41 = scalar_select %p40, 0, %s39
      %s42 = ssub.s32 %s29, %s41
      %s43 = ssub.s32 %s30, %s37
      %s44 = sor.u32 %s42, %s43
      %p45 = scmp.eq.s32.totalorder %s44, 0
      %s47 = sadd.s32 %s46, 1
      %s48 = scalar_select %p45, %s46, %s47
      %p51 = pneg %p45
      %p52 = scmp.eq.s32.totalorder %s22, 1
      %p53 = por %p51, %p52
      %p54 = scmp.ne.s32.totalorder %s46, %s49
      %p55 = scmp.eq.s32.totalorder %s22, 0
      %p56 = por %p54, %p55
      %p57 = scmp.ne.s32.totalorder %s46, %s49
      %p58 = scmp.eq.s32.totalorder %s27, 1
      %p59 = por %p57, %p58
      %p60 = scmp.ne.s32.totalorder %s49, %s50
      %p61 = scmp.eq.s32.totalorder %s27, 0
      %p62 = por %p60, %p61
      %p63 = scmp.ne.s32.totalorder %s49, %s50
      %p64 = scmp.eq.s32.totalorder %s28, 1
      %p65 = por %p63, %p64
      %p67 = scmp.ne.s32.totalorder %s50, %s66
      %p68 = scmp.eq.s32.totalorder %s28, 0
      %p69 = por %p67, %p68
      %s71 = sadd.s32 %s70, 1
      %p74 = scmp.eq.s32.totalorder %s22, 1
      %p75 = scmp.ne.s32.totalorder %s70, %s72
      %p76 = scmp.eq.s32.totalorder %s22, 0
      %p77 = por %p75, %p76
      %p78 = scmp.ne.s32.totalorder %s70, %s72
      %p79 = scmp.eq.s32.totalorder %s27, 1
      %p80 = por %p78, %p79
      %p81 = scmp.ne.s32.totalorder %s72, %s73
      %p82 = scmp.eq.s32.totalorder %s27, 0
      %p83 = por %p81, %p82
      %p84 = scmp.ne.s32.totalorder %s72, %s73
      %p85 = scmp.eq.s32.totalorder %s28, 1
      %p86 = por %p84, %p85
      %p88 = scmp.ne.s32.totalorder %s73, %s87
      %p89 = scmp.eq.s32.totalorder %s28, 0
      %p90 = por %p88, %p89
      %s92 = sadd.s32 %s91, 1
      %p95 = scmp.eq.s32.totalorder %s22, 1
      %p96 = scmp.ne.s32.totalorder %s91, %s93
      %p97 = scmp.eq.s32.totalorder %s22, 0
      %p98 = por %p96, %p97
      %p99 = scmp.ne.s32.totalorder %s91, %s93
      %p100 = scmp.eq.s32.totalorder %s27, 1
      %p101 = por %p99, %p100
      %p102 = scmp.ne.s32.totalorder %s93, %s94
      %p103 = scmp.eq.s32.totalorder %s27, 0
      %p104 = por %p102, %p103
      %p105 = scmp.ne.s32.totalorder %s93, %s94
      %p106 = scmp.eq.s32.totalorder %s28, 1
      %p107 = por %p105, %p106
      %p109 = scmp.ne.s32.totalorder %s94, %s108
      %p110 = scmp.eq.s32.totalorder %s28, 0
      %p111 = por %p109, %p110
      %s113 = sadd.s32 %s112, 1
      %p116 = scmp.eq.s32.totalorder %s22, 1
      %p117 = scmp.ne.s32.totalorder %s112, %s114
      %p118 = scmp.eq.s32.totalorder %s22, 0
      %p119 = por %p117, %p118
      %p120 = scmp.ne.s32.totalorder %s112, %s114
      %p121 = scmp.eq.s32.totalorder %s27, 1
      %p122 = por %p120, %p121
      %p123 = scmp.ne.s32.totalorder %s114, %s115
      %p124 = scmp.eq.s32.totalorder %s27, 0
      %p125 = por %p123, %p124
      %p126 = scmp.ne.s32.totalorder %s114, %s115
      %p127 = scmp.eq.s32.totalorder %s28, 1
      %p128 = por %p126, %p127
      %p130 = scmp.ne.s32.totalorder %s115, %s129
      %p131 = scmp.eq.s32.totalorder %s28, 0
      %p132 = por %p130, %p131
      %s134 = sadd.s32 %s133, 1
      %p137 = scmp.eq.s32.totalorder %s22, 1
      %p138 = scmp.ne.s32.totalorder %s133, %s135
      %p139 = scmp.eq.s32.totalorder %s22, 0
      %p140 = por %p138, %p139
      %p141 = scmp.ne.s32.totalorder %s133, %s135
      %p142 = scmp.eq.s32.totalorder %s27, 1
      %p143 = por %p141, %p142
      %p144 = scmp.ne.s32.totalorder %s135, %s136
      %p145 = scmp.eq.s32.totalorder %s27, 0
      %p146 = por %p144, %p145
      %p147 = scmp.ne.s32.totalorder %s135, %s136
      %p148 = scmp.eq.s32.totalorder %s28, 1
      %p149 = por %p147, %p148
      %p151 = scmp.ne.s32.totalorder %s136, %s150
      %p152 = scmp.eq.s32.totalorder %s28, 0
      %p153 = por %p151, %p152
      %s155 = sadd.s32 %s154, 1
      %p158 = scmp.eq.s32.totalorder %s22, 1
      %p159 = scmp.ne.s32.totalorder %s154, %s156
      %p160 = scmp.eq.s32.totalorder %s22, 0
      %p161 = por %p159, %p160
      %p162 = scmp.ne.s32.totalorder %s154, %s156
      %p163 = scmp.eq.s32.totalorder %s27, 1
      %p164 = por %p162, %p163
      %p165 = scmp.ne.s32.totalorder %s156, %s157
      %p166 = scmp.eq.s32.totalorder %s27, 0
      %p167 = por %p165, %p166
      %p168 = scmp.ne.s32.totalorder %s156, %s157
      %p169 = scmp.eq.s32.totalorder %s28, 1
      %p170 = por %p168, %p169
      %p172 = scmp.ne.s32.totalorder %s157, %s171
      %p173 = scmp.eq.s32.totalorder %s28, 0
      %p174 = por %p172, %p173
      %s176 = sadd.s32 %s175, 1
      %p179 = scmp.eq.s32.totalorder %s22, 1
      %p180 = scmp.ne.s32.totalorder %s175, %s177
      %p181 = scmp.eq.s32.totalorder %s22, 0
      %p182 = por %p180, %p181
      %p183 = scmp.ne.s32.totalorder %s175, %s177
      %p184 = scmp.eq.s32.totalorder %s27, 1
      %p185 = por %p183, %p184
      %p186 = scmp.ne.s32.totalorder %s177, %s178
      %p187 = scmp.eq.s32.totalorder %s27, 0
      %p188 = por %p186, %p187
      %p189 = scmp.ne.s32.totalorder %s177, %s178
      %p190 = scmp.eq.s32.totalorder %s28, 1
      %p191 = por %p189, %p190
      %p193 = scmp.ne.s32.totalorder %s178, %s192
      %p194 = scmp.eq.s32.totalorder %s28, 0
      %p195 = por %p193, %p194
      %s196 = ssub.s32 %s29, %s41
      %s197 = ssub.s32 %s30, %s37
      %s198 = sor.u32 %s196, %s197
      %p199 = scmp.eq.s32.totalorder %s198, 0
      %s201 = sadd.s32 %s200, 1
      %s202 = scalar_select %p199, %s200, %s201
      %p205 = pneg %p199
      %p206 = scmp.eq.s32.totalorder %s22, 1
      %p207 = por %p205, %p206
      %p208 = scmp.ne.s32.totalorder %s200, %s203
      %p209 = scmp.eq.s32.totalorder %s22, 0
      %p210 = por %p208, %p209
      %p211 = scmp.ne.s32.totalorder %s200, %s203
      %p212 = scmp.eq.s32.totalorder %s27, 1
      %p213 = por %p211, %p212
      %p214 = scmp.ne.s32.totalorder %s203, %s204
      %p215 = scmp.eq.s32.totalorder %s27, 0
      %p216 = por %p214, %p215
      %p217 = scmp.ne.s32.totalorder %s203, %s204
      %p218 = scmp.eq.s32.totalorder %s28, 1
      %p219 = por %p217, %p218
      %p221 = scmp.ne.s32.totalorder %s204, %s220
      %p222 = scmp.eq.s32.totalorder %s28, 0
      %p223 = por %p221, %p222
      %p224 = scmp.le.s32.totalorder 1, %s22
      %p225 = scmp.lt.s32.totalorder %s22, 3
      %p226 = pnand %p224, %p225
      %p227 = pneg %p226
      // Predicated region
      $region9: #{tpu_custom_call.1} parent=5 // pred_check
        _
      $region10: #{tpu_custom_call.1} parent=5 // pred_check_branch
        %229 = sbr.rel (%p226) target = $region12
      $region11: #{tpu_custom_call.1} parent=5 // pred_region
        %s230 = ssub.s32 %s22, 1
        // Predicated region
        $region13: #{tpu_custom_call.1} parent=11 // pred_check
          %p231 = pneg %p83
        $region14: #{tpu_custom_call.1} parent=11 // pred_check_branch
          %233 = sbr.rel (%p231) target = $region16
        $region15: #{tpu_custom_call.1} parent=11 // pred_region
          %s235 = ssub.s32 32, 32
          %236 = vsyncadd [#allocation6], %s235
          %s238 = sshll.u32 [#allocation5], 4
          %s239 = int_to_ptr.vmem [resolvable:$true] %s238
          %241 = dma.hbm_to_vmem [thread:$0]  %s1, 32, %s239, [#allocation6]
        $region16: #{tpu_custom_call.1} parent=11 // pred_fallthru
          _
        // Predicated region
        $region17: #{tpu_custom_call.1} parent=11 // pred_check
          %p242 = pneg %p104
        $region18: #{tpu_custom_call.1} parent=11 // pred_check_branch
          %244 = sbr.rel (%p242) target = $region20
        $region19: #{tpu_custom_call.1} parent=11 // pred_region
          %s246 = ssub.s32 16, 16
          %247 = vsyncadd [#allocation6], %s246
          %s249 = sshll.u32 [#allocation7], 4
          %s250 = int_to_ptr.vmem [resolvable:$true] %s249
          %252 = dma.hbm_to_vmem [thread:$0]  %s2, 16, %s250, [#allocation6]
        $region20: #{tpu_custom_call.1} parent=11 // pred_fallthru
          _
        // Predicated region
        $region21: #{tpu_custom_call.1} parent=11 // pred_check
          %p253 = pneg %p125
        $region22: #{tpu_custom_call.1} parent=11 // pred_check_branch
          %255 = sbr.rel (%p253) target = $region24
        $region23: #{tpu_custom_call.1} parent=11 // pred_region
          %s257 = ssub.s32 16, 16
          %258 = vsyncadd [#allocation9], %s257
          %s260 = sshll.u32 [#allocation8], 4
          %s261 = int_to_ptr.vmem [resolvable:$true] %s260
          %263 = dma.hbm_to_vmem [thread:$0]  %s3, 16, %s261, [#allocation9]
        $region24: #{tpu_custom_call.1} parent=11 // pred_fallthru
          _
        // Predicated region
        $region25: #{tpu_custom_call.1} parent=11 // pred_check
          %p264 = pneg %p146
        $region26: #{tpu_custom_call.1} parent=11 // pred_check_branch
          %266 = sbr.rel (%p264) target = $region28
        $region27: #{tpu_custom_call.1} parent=11 // pred_region
          %s268 = ssub.s32 16, 16
          %269 = vsyncadd [#allocation9], %s268
          %s271 = sshll.u32 [#allocation10], 4
          %s272 = int_to_ptr.vmem [resolvable:$true] %s271
          %274 = dma.hbm_to_vmem [thread:$0]  %s4, 16, %s272, [#allocation9]
        $region28: #{tpu_custom_call.1} parent=11 // pred_fallthru
          _
        // Predicated region
        $region29: #{tpu_custom_call.1} parent=11 // pred_check
          %p275 = pneg %p167
        $region30: #{tpu_custom_call.1} parent=11 // pred_check_branch
          %277 = sbr.rel (%p275) target = $region32
        $region31: #{tpu_custom_call.1} parent=11 // pred_region
          %s279 = ssub.s32 2048, 2048
          %280 = vsyncadd [#allocation12], %s279
          %s281 = sshll.u32 [#allocation11], 4
          %s282 = int_to_ptr.vmem [resolvable:$true] %s281
          %287 = dma.hbm_to_vmem [thread:$0]  %s5, 2048, %s282, [#allocation12], 128, 128, 8
        $region32: #{tpu_custom_call.1} parent=11 // pred_fallthru
          _
        // Predicated region
        $region33: #{tpu_custom_call.1} parent=11 // pred_check
          %p288 = pneg %p188
        $region34: #{tpu_custom_call.1} parent=11 // pred_check_branch
          %290 = sbr.rel (%p288) target = $region36
        $region35: #{tpu_custom_call.1} parent=11 // pred_region
          %s292 = ssub.s32 64, 64
          %293 = vsyncadd [#allocation12], %s292
          %s295 = sshll.u32 [#allocation13], 4
          %s296 = int_to_ptr.vmem [resolvable:$true] %s295
          %298 = dma.hbm_to_vmem [thread:$0]  %s6, 64, %s296, [#allocation12]
        $region36: #{tpu_custom_call.1} parent=11 // pred_fallthru
          _
      $region12: #{tpu_custom_call.1} parent=5 // pred_fallthru
        _
      %p299 = scmp.lt.s32.totalorder %s22, 2
      // Predicated region
      $region37: #{tpu_custom_call.1} parent=5 // pred_check
        %p300 = pneg %p299
      $region38: #{tpu_custom_call.1} parent=5 // pred_check_branch
        %302 = sbr.rel (%p300) target = $region40
      $region39: #{tpu_custom_call.1} parent=5 // pred_region
        // Predicated region
        $region41: #{tpu_custom_call.1} parent=39 // pred_check
          %p303 = pneg %p56
        $region42: #{tpu_custom_call.1} parent=39 // pred_check_branch
          %305 = sbr.rel (%p303) target = $region44
        $region43: #{tpu_custom_call.1} parent=39 // pred_region
          %s306 = sand.u32 %s46, 1
          %s307 = scalar_lea.sflag [#allocation3], %s306
          %s308 = sand.u32 %s46, 1
          %s309 = smul.addr %s308, 8
          %s310 = scalar_lea.vmem [#allocation2], %s309
          %s311 = smul.u32 2, %s30
          %s313 = ssub.s32 128, 128
          %314 = vsyncadd %s307, %s313
          %s315 = smul.addr %s29, 2
          %s316 = sadd.s32 %s311, %s315
          %s317 = smul.addr %s316, 64
          %s318 = scalar_lea.hbm %s0, %s317
          %s320 = sshll.u32 %s310, 4
          %s321 = int_to_ptr.vmem [resolvable:$true] %s320
          %323 = dma.hbm_to_vmem [thread:$0]  %s318, 128, %s321, %s307
        $region44: #{tpu_custom_call.1} parent=39 // pred_fallthru
          _
      $region40: #{tpu_custom_call.1} parent=5 // pred_fallthru
        _
      %p324 = scmp.le.s32.totalorder 1, %s22
      %p325 = scmp.lt.s32.totalorder %s22, 3
      %p326 = pnand %p324, %p325
      %p327 = pneg %p326
      // Predicated region
      $region45: #{tpu_custom_call.1} parent=5 // pred_check
        _
      $region46: #{tpu_custom_call.1} parent=5 // pred_check_branch
        %329 = sbr.rel (%p326) target = $region48
      $region47: #{tpu_custom_call.1} parent=5 // pred_region
        %s330 = ssub.s32 %s22, 1
        %s331 = sand.u32 %s49, 1
        %s332 = scalar_lea.sflag [#allocation3], %s331
        %s333 = sand.u32 %s49, 1
        %s334 = smul.addr %s333, 8
        %s335 = scalar_lea.vmem [#allocation2], %s334
        // Predicated region
        $region49: #{tpu_custom_call.1} parent=47 // pred_check
          %p336 = pneg %p62
        $region50: #{tpu_custom_call.1} parent=47 // pred_check_branch
          %338 = sbr.rel (%p336) target = $region52
        $region51: #{tpu_custom_call.1} parent=47 // pred_region
          %339 = dma.done %s332, 128
        $region52: #{tpu_custom_call.1} parent=47 // pred_fallthru
          _
        // Predicated region
        $region53: #{tpu_custom_call.1} parent=47 // pred_check
          %p340 = pneg %p83
        $region54: #{tpu_custom_call.1} parent=47 // pred_check_branch
          %342 = sbr.rel (%p340) target = $region56
        $region55: #{tpu_custom_call.1} parent=47 // pred_region
          %343 = dma.done [#allocation6], 32
        $region56: #{tpu_custom_call.1} parent=47 // pred_fallthru
          _
        // Predicated region
        $region57: #{tpu_custom_call.1} parent=47 // pred_check
          %p344 = pneg %p104
        $region58: #{tpu_custom_call.1} parent=47 // pred_check_branch
          %346 = sbr.rel (%p344) target = $region60
        $region59: #{tpu_custom_call.1} parent=47 // pred_region
          %347 = dma.done [#allocation6], 16
        $region60: #{tpu_custom_call.1} parent=47 // pred_fallthru
          _
        // Predicated region
        $region61: #{tpu_custom_call.1} parent=47 // pred_check
          %p348 = pneg %p125
        $region62: #{tpu_custom_call.1} parent=47 // pred_check_branch
          %350 = sbr.rel (%p348) target = $region64
        $region63: #{tpu_custom_call.1} parent=47 // pred_region
          %351 = dma.done [#allocation9], 16
        $region64: #{tpu_custom_call.1} parent=47 // pred_fallthru
          _
        // Predicated region
        $region65: #{tpu_custom_call.1} parent=47 // pred_check
          %p352 = pneg %p146
        $region66: #{tpu_custom_call.1} parent=47 // pred_check_branch
          %354 = sbr.rel (%p352) target = $region68
        $region67: #{tpu_custom_call.1} parent=47 // pred_region
          %355 = dma.done [#allocation9], 16
        $region68: #{tpu_custom_call.1} parent=47 // pred_fallthru
          _
        // Predicated region
        $region69: #{tpu_custom_call.1} parent=47 // pred_check
          %p356 = pneg %p167
        $region70: #{tpu_custom_call.1} parent=47 // pred_check_branch
          %358 = sbr.rel (%p356) target = $region72
        $region71: #{tpu_custom_call.1} parent=47 // pred_region
          %359 = dma.done [#allocation12], 2048
        $region72: #{tpu_custom_call.1} parent=47 // pred_fallthru
          _
        // Predicated region
        $region73: #{tpu_custom_call.1} parent=47 // pred_check
          %p360 = pneg %p188
        $region74: #{tpu_custom_call.1} parent=47 // pred_check_branch
          %362 = sbr.rel (%p360) target = $region76
        $region75: #{tpu_custom_call.1} parent=47 // pred_region
          %363 = dma.done [#allocation12], 64
        $region76: #{tpu_custom_call.1} parent=47 // pred_fallthru
          _
        %s364 = sand.u32 %s49, 1
        %s365 = scalar_lea.sflag [#allocation3], %s364
        %s366 = sand.u32 %s49, 1
        %s367 = smul.addr %s366, 8
        %s368 = scalar_lea.vmem [#allocation2], %s367
        %p369 = pneg %p62
        %p370 = pneg %p59
        %p371 = pneg %p83
        %p372 = pneg %p80
        %p373 = pneg %p104
        %p374 = pneg %p101
        %p375 = pneg %p125
        %p376 = pneg %p122
        %p377 = pneg %p146
        %p378 = pneg %p143
        %p379 = pneg %p167
        %p380 = pneg %p164
        %p381 = pneg %p188
        %p382 = pneg %p185
        %p383 = pneg %p216
        %p384 = pneg %p213
        %s385 = sand.u32 %s203, 1
        %s386 = scalar_lea.sflag [#allocation4], %s385
        %s387 = sand.u32 %s203, 1
        %s388 = smul.addr %s387, 512
        %s389 = scalar_lea.vmem [#allocation14], %s388
        %s390 = smul.u32 2, %s32
        %s391 = smul.u32 16, %s32
        %v393 = vld [vmem:[%s335] sm:$0xff]
        %v395 = vcombine.high %v393, %v393
        %v397 = vpack.c.bf16 %v393, %v393
        %v398 = vpack.c.bf16 %v395, %v395
        %v399 = vld [vmem:[#allocation5] sm:$0x3]
        %v400 = vld [vmem:[#allocation7] sm:$0x1]
        %v402 = vlaneseq
        %v403 = vshrl.u32 %v402, 7
        %v404 = vsub.s32 0, %v403
        %v405 = vrot.slane %v400, %v404
        %407 = vxpose.xlu0.c.b16.start [1/8] %v397, 128
        %408 = vxpose.xlu0.c.b16.cont [2/8] 0, 128
        %409 = vxpose.xlu0.c.b16.cont [3/8] 0, 128
        %410 = vxpose.xlu0.c.b16.cont [4/8] 0, 128
        %411 = vxpose.xlu0.c.b16.cont [5/8] 0, 128
        %412 = vxpose.xlu0.c.b16.cont [6/8] 0, 128
        %413 = vxpose.xlu0.c.b16.cont [7/8] 0, 128
        %414 = vxpose.xlu0.c.b16.end [8/8] 0, 128
        %v415 = vpop.trf.xlu0
        %v416 = vpop.trf.xlu0
        %v417 = vpop.trf.xlu0
        %v418 = vpop.trf.xlu0
        %v419 = vpop.trf.xlu0
        %v420 = vpop.trf.xlu0
        %v421 = vpop.trf.xlu0
        %v422 = vpop.trf.xlu0
        %423 = vxpose.xlu0.c.b16.start [1/8] %v398, 128
        %424 = vxpose.xlu0.c.b16.cont [2/8] 0, 128
        %425 = vxpose.xlu0.c.b16.cont [3/8] 0, 128
        %426 = vxpose.xlu0.c.b16.cont [4/8] 0, 128
        %427 = vxpose.xlu0.c.b16.cont [5/8] 0, 128
        %428 = vxpose.xlu0.c.b16.cont [6/8] 0, 128
        %429 = vxpose.xlu0.c.b16.cont [7/8] 0, 128
        %430 = vxpose.xlu0.c.b16.end [8/8] 0, 128
        %v431 = vpop.trf.xlu0
        %v432 = vpop.trf.xlu0
        %v433 = vpop.trf.xlu0
        %v434 = vpop.trf.xlu0
        %v435 = vpop.trf.xlu0
        %v436 = vpop.trf.xlu0
        %v437 = vpop.trf.xlu0
        %v438 = vpop.trf.xlu0
        %vm439 = vcmask 31744
        %v441 = vsel %vm439, %v415, 0
        %v444 = vsel %vm439, %v416, 0
        %v447 = vsel %vm439, %v417, 0
        %v450 = vsel %vm439, %v418, 0
        %v453 = vsel %vm439, %v419, 0
        %v456 = vsel %vm439, %v420, 0
        %v459 = vsel %vm439, %v421, 0
        %v462 = vsel %vm439, %v422, 0
        %v465 = vsel %vm439, %v431, 0
        %v468 = vsel %vm439, %v432, 0
        %v471 = vsel %vm439, %v433, 0
        %v474 = vsel %vm439, %v434, 0
        %v477 = vsel %vm439, %v435, 0
        %v480 = vsel %vm439, %v436, 0
        %v483 = vsel %vm439, %v437, 0
        %v486 = vsel %vm439, %v438, 0
        %vm488 = vcmask 1041408
        %v490 = vsel %vm488, %v399, 0
        %492 = vmatprep.subr.bf16.mxu0 0
        %493 = vmatpush1.bf16.msra.mxu0 %v490
        %494 = vmatprep.subr.bf16.mxu0 0
        %495 = vmatpush1.bf16.msra.mxu0 0
        %496 = vmatprep.subr.bf16.mxu0 0
        %497 = vmatpush1.bf16.msra.mxu0 0
        %498 = vmatprep.subr.bf16.mxu0 0
        %499 = vmatpush1.bf16.msra.mxu0 0
        %500 = vmatprep.subr.bf16.mxu0 0
        %501 = vmatpush1.bf16.msra.mxu0 0
        %502 = vmatprep.subr.bf16.mxu0 0
        %503 = vmatpush1.bf16.msra.mxu0 0
        %504 = vmatprep.subr.bf16.mxu0 0
        %505 = vmatpush1.bf16.msra.mxu0 0
        %506 = vmatprep.subr.bf16.mxu0 0
        %507 = vmatpush1.bf16.msra.mxu0 0
        %508 = vmatprep.subr.bf16.mxu0 0
        %509 = vmatpush1.bf16.msra.mxu0 0
        %510 = vmatprep.subr.bf16.mxu0 0
        %511 = vmatpush1.bf16.msra.mxu0 0
        %512 = vmatprep.subr.bf16.mxu0 0
        %513 = vmatpush1.bf16.msra.mxu0 0
        %514 = vmatprep.subr.bf16.mxu0 0
        %515 = vmatpush1.bf16.msra.mxu0 0
        %516 = vmatprep.subr.bf16.mxu0 0
        %517 = vmatpush1.bf16.msra.mxu0 0
        %518 = vmatprep.subr.bf16.mxu0 0
        %519 = vmatpush1.bf16.msra.mxu0 0
        %520 = vmatprep.subr.bf16.mxu0 0
        %521 = vmatpush1.bf16.msra.mxu0 0
        %522 = vmatprep.subr.bf16.mxu0 0
        %523 = vmatpush1.bf16.msra.mxu0 0
        %524 = vmatprep.mubr.bf16.mxu0 0
        %525 = vmatmul.mubr.bf16.gmra.mrb[0].mxu0 %v441
        %v526 = vpop.f32.mrb[0].mxu0
        %v527 = vadd.f32 %v405, %v526
        %v528 = vpop.f32.mrb[0].mxu0
        %v529 = vpop.f32.mrb[0].mxu0
        %v530 = vadd.f32 %v405, %v529
        %v531 = vpop.f32.mrb[0].mxu0
        %532 = vmatprep.mubr.bf16.mxu0 0
        %533 = vmatmul.mubr.bf16.gmra.mrb[0].mxu0 %v444
        %v534 = vpop.f32.mrb[0].mxu0
        %v535 = vadd.f32 %v405, %v534
        %v536 = vpop.f32.mrb[0].mxu0
        %v537 = vpop.f32.mrb[0].mxu0
        %v538 = vadd.f32 %v405, %v537
        %v539 = vpop.f32.mrb[0].mxu0
        %540 = vmatprep.mubr.bf16.mxu0 0
        %541 = vmatmul.mubr.bf16.gmra.mrb[0].mxu0 %v447
        %v542 = vpop.f32.mrb[0].mxu0
        %v543 = vadd.f32 %v405, %v542
        %v544 = vpop.f32.mrb[0].mxu0
        %v545 = vpop.f32.mrb[0].mxu0
        %v546 = vadd.f32 %v405, %v545
        %v547 = vpop.f32.mrb[0].mxu0
        %548 = vmatprep.mubr.bf16.mxu0 0
        %549 = vmatmul.mubr.bf16.gmra.mrb[0].mxu0 %v450
        %v550 = vpop.f32.mrb[0].mxu0
        %v551 = vadd.f32 %v405, %v550
        %v552 = vpop.f32.mrb[0].mxu0
        %v553 = vpop.f32.mrb[0].mxu0
        %v554 = vadd.f32 %v405, %v553
        %v555 = vpop.f32.mrb[0].mxu0
        %556 = vmatprep.mubr.bf16.mxu0 0
        %557 = vmatmul.mubr.bf16.gmra.mrb[0].mxu0 %v453
        %v558 = vpop.f32.mrb[0].mxu0
        %v559 = vadd.f32 %v405, %v558
        %v560 = vpop.f32.mrb[0].mxu0
        %v561 = vpop.f32.mrb[0].mxu0
        %v562 = vadd.f32 %v405, %v561
        %v563 = vpop.f32.mrb[0].mxu0
        %564 = vmatprep.mubr.bf16.mxu0 0
        %565 = vmatmul.mubr.bf16.gmra.mrb[0].mxu0 %v456
        %v566 = vpop.f32.mrb[0].mxu0
        %v567 = vadd.f32 %v405, %v566
        %v568 = vpop.f32.mrb[0].mxu0
        %v569 = vpop.f32.mrb[0].mxu0
        %v570 = vadd.f32 %v405, %v569
        %v571 = vpop.f32.mrb[0].mxu0
        %572 = vmatprep.mubr.bf16.mxu0 0
        %573 = vmatmul.mubr.bf16.gmra.mrb[0].mxu0 %v459
        %v574 = vpop.f32.mrb[0].mxu0
        %v575 = vadd.f32 %v405, %v574
        %v576 = vpop.f32.mrb[0].mxu0
        %v577 = vpop.f32.mrb[0].mxu0
        %v578 = vadd.f32 %v405, %v577
        %v579 = vpop.f32.mrb[0].mxu0
        %580 = vmatprep.mubr.bf16.mxu0 0
        %581 = vmatmul.mubr.bf16.gmra.mrb[0].mxu0 %v462
        %v582 = vpop.f32.mrb[0].mxu0
        %v583 = vadd.f32 %v405, %v582
        %v584 = vpop.f32.mrb[0].mxu0
        %v585 = vpop.f32.mrb[0].mxu0
        %v586 = vadd.f32 %v405, %v585
        %v587 = vpop.f32.mrb[0].mxu0
        %588 = vmatprep.mubr.bf16.mxu0 0
        %589 = vmatmul.mubr.bf16.gmra.mrb[0].mxu0 %v465
        %v590 = vpop.f32.mrb[0].mxu0
        %v591 = vadd.f32 %v405, %v590
        %v592 = vpop.f32.mrb[0].mxu0
        %v593 = vpop.f32.mrb[0].mxu0
        %v594 = vadd.f32 %v405, %v593
        %v595 = vpop.f32.mrb[0].mxu0
        %596 = vmatprep.mubr.bf16.mxu0 0
        %597 = vmatmul.mubr.bf16.gmra.mrb[0].mxu0 %v468
        %v598 = vpop.f32.mrb[0].mxu0
        %v599 = vadd.f32 %v405, %v598
        %v600 = vpop.f32.mrb[0].mxu0
        %v601 = vpop.f32.mrb[0].mxu0
        %v602 = vadd.f32 %v405, %v601
        %v603 = vpop.f32.mrb[0].mxu0
        %604 = vmatprep.mubr.bf16.mxu0 0
        %605 = vmatmul.mubr.bf16.gmra.mrb[0].mxu0 %v471
        %v606 = vpop.f32.mrb[0].mxu0
        %v607 = vadd.f32 %v405, %v606
        %v608 = vpop.f32.mrb[0].mxu0
        %v609 = vpop.f32.mrb[0].mxu0
        %v610 = vadd.f32 %v405, %v609
        %v611 = vpop.f32.mrb[0].mxu0
        %612 = vmatprep.mubr.bf16.mxu0 0
        %613 = vmatmul.mubr.bf16.gmra.mrb[0].mxu0 %v474
        %v614 = vpop.f32.mrb[0].mxu0
        %v615 = vadd.f32 %v405, %v614
        %v616 = vpop.f32.mrb[0].mxu0
        %v617 = vpop.f32.mrb[0].mxu0
        %v618 = vadd.f32 %v405, %v617
        %v619 = vpop.f32.mrb[0].mxu0
        %620 = vmatprep.mubr.bf16.mxu0 0
        %621 = vmatmul.mubr.bf16.gmra.mrb[0].mxu0 %v477
        %v622 = vpop.f32.mrb[0].mxu0
        %v623 = vadd.f32 %v405, %v622
        %v624 = vpop.f32.mrb[0].mxu0
        %v625 = vpop.f32.mrb[0].mxu0
        %v626 = vadd.f32 %v405, %v625
        %v627 = vpop.f32.mrb[0].mxu0
        %628 = vmatprep.mubr.bf16.mxu0 0
        %629 = vmatmul.mubr.bf16.gmra.mrb[0].mxu0 %v480
        %v630 = vpop.f32.mrb[0].mxu0
        %v631 = vadd.f32 %v405, %v630
        %v632 = vpop.f32.mrb[0].mxu0
        %v633 = vpop.f32.mrb[0].mxu0
        %v634 = vadd.f32 %v405, %v633
        %v635 = vpop.f32.mrb[0].mxu0
        %636 = vmatprep.mubr.bf16.mxu0 0
        %637 = vmatmul.mubr.bf16.gmra.mrb[0].mxu0 %v483
        %v638 = vpop.f32.mrb[0].mxu0
        %v639 = vadd.f32 %v405, %v638
        %v640 = vpop.f32.mrb[0].mxu0
        %v641 = vpop.f32.mrb[0].mxu0
        %v642 = vadd.f32 %v405, %v641
        %v643 = vpop.f32.mrb[0].mxu0
        %644 = vmatprep.mubr.bf16.mxu0 0
        %645 = vmatmul.mubr.bf16.gmra.mrb[0].mxu0 %v486
        %v646 = vpop.f32.mrb[0].mxu0
        %v647 = vadd.f32 %v405, %v646
        %v648 = vpop.f32.mrb[0].mxu0
        %v649 = vpop.f32.mrb[0].mxu0
        %v650 = vadd.f32 %v405, %v649
        %v651 = vpop.f32.mrb[0].mxu0
        %652 = vdwg.mxu0
        %v653 = vld [vmem:[#allocation11] sm:$0xff]
        %v654 = vld [vmem:[#allocation11 + $0x8] sm:$0xff]
        %v655 = vld [vmem:[#allocation11 + $0x10] sm:$0xff]
        %v656 = vld [vmem:[#allocation11 + $0x18] sm:$0xff]
        %v657 = vld [vmem:[#allocation11 + $0x20] sm:$0xff]
        %v658 = vld [vmem:[#allocation11 + $0x28] sm:$0xff]
        %v659 = vld [vmem:[#allocation11 + $0x30] sm:$0xff]
        %v660 = vld [vmem:[#allocation11 + $0x38] sm:$0xff]
        %v661 = vld [vmem:[#allocation11 + $0x40] sm:$0xff]
        %v662 = vld [vmem:[#allocation11 + $0x48] sm:$0xff]
        %v663 = vld [vmem:[#allocation11 + $0x50] sm:$0xff]
        %v664 = vld [vmem:[#allocation11 + $0x58] sm:$0xff]
        %v665 = vld [vmem:[#allocation11 + $0x60] sm:$0xff]
        %v666 = vld [vmem:[#allocation11 + $0x68] sm:$0xff]
        %v667 = vld [vmem:[#allocation11 + $0x70] sm:$0xff]
        %v668 = vld [vmem:[#allocation11 + $0x78] sm:$0xff]
        %v669 = vld [vmem:[#allocation13] sm:$0xf]
        %670 = vmatprep.subr.mxu0 0.0
        %671 = vmatpush1.msra.mxu0 %v653
        %672 = vmatprep.subr.mxu0 0.0
        %673 = vmatpush1.msra.mxu0 %v654
        %674 = vmatprep.subr.mxu0 0.0
        %675 = vmatpush1.msra.mxu0 %v655
        %676 = vmatprep.subr.mxu0 0.0
        %677 = vmatpush1.msra.mxu0 %v656
        %678 = vmatprep.subr.mxu0 0.0
        %679 = vmatpush1.msra.mxu0 %v657
        %680 = vmatprep.subr.mxu0 0.0
        %681 = vmatpush1.msra.mxu0 %v658
        %682 = vmatprep.subr.mxu0 0.0
        %683 = vmatpush1.msra.mxu0 %v659
        %684 = vmatprep.subr.mxu0 0.0
        %685 = vmatpush1.msra.mxu0 %v660
        %686 = vmatprep.subr.mxu0 0.0
        %687 = vmatpush1.msra.mxu0 %v661
        %688 = vmatprep.subr.mxu0 0.0
        %689 = vmatpush1.msra.mxu0 %v662
        %690 = vmatprep.subr.mxu0 0.0
        %691 = vmatpush1.msra.mxu0 %v663
        %692 = vmatprep.subr.mxu0 0.0
        %693 = vmatpush1.msra.mxu0 %v664
        %694 = vmatprep.subr.mxu0 0.0
        %695 = vmatpush1.msra.mxu0 %v665
        %696 = vmatprep.subr.mxu0 0.0
        %697 = vmatpush1.msra.mxu0 %v666
        %698 = vmatprep.subr.mxu0 0.0
        %699 = vmatpush1.msra.mxu0 %v667
        %700 = vmatprep.subr.mxu0 0.0
        %701 = vmatpush1.msra.mxu0 %v668
        %702 = vmatprep.subr.mxu0 0.0
        %703 = vmatpush1.msra.mxu0 0.0
        %704 = vmatprep.subr.mxu0 0.0
        %705 = vmatpush1.msra.mxu0 0.0
        %706 = vmatprep.subr.mxu0 0.0
        %707 = vmatpush1.msra.mxu0 0.0
        %708 = vmatprep.subr.mxu0 0.0
        %709 = vmatpush1.msra.mxu0 0.0
        %710 = vmatprep.subr.mxu0 0.0
        %711 = vmatpush1.msra.mxu0 0.0
        %712 = vmatprep.subr.mxu0 0.0
        %713 = vmatpush1.msra.mxu0 0.0
        %714 = vmatprep.subr.mxu0 0.0
        %715 = vmatpush1.msra.mxu0 0.0
        %716 = vmatprep.subr.mxu0 0.0
        %717 = vmatpush1.msra.mxu0 0.0
        %718 = vmatprep.subr.mxu0 0.0
        %719 = vmatpush1.msra.mxu0 0.0
        %720 = vmatprep.subr.mxu0 0.0
        %721 = vmatpush1.msra.mxu0 0.0
        %722 = vmatprep.subr.mxu0 0.0
        %723 = vmatpush1.msra.mxu0 0.0
        %724 = vmatprep.subr.mxu0 0.0
        %725 = vmatpush1.msra.mxu0 0.0
        %726 = vmatprep.subr.mxu0 0.0
        %727 = vmatpush1.msra.mxu0 0.0
        %728 = vmatprep.subr.mxu0 0.0
        %729 = vmatpush1.msra.mxu0 0.0
        %730 = vmatprep.subr.mxu0 0.0
        %731 = vmatpush1.msra.mxu0 0.0
        %732 = vmatprep.subr.mxu0 0.0
        %733 = vmatpush1.msra.mxu0 0.0
        %734 = vmatprep.mubr.f32.mxu0 0.0
        %735 = vmatmul.mubr.f32.gmra.mrb[0].mxu0 %v527
        %v736 = vpop.f32.mrb[0].mxu0
        %v737 = vadd.f32 0.0, %v736
        %v738 = vpop.f32.mrb[0].mxu0
        %739 = vmatprep.mubr.f32.mxu0 0.0
        %740 = vmatmul.mubr.f32.gmra.mrb[0].mxu0 %v530
        %v741 = vpop.f32.mrb[0].mxu0
        %v742 = vadd.f32 0.0, %v741
        %v743 = vpop.f32.mrb[0].mxu0
        %744 = vmatprep.mubr.f32.mxu0 0.0
        %745 = vmatmul.mubr.f32.gmra.mrb[0].mxu0 %v535
        %v746 = vpop.f32.mrb[0].mxu0
        %v747 = vadd.f32 0.0, %v746
        %v748 = vpop.f32.mrb[0].mxu0
        %749 = vmatprep.mubr.f32.mxu0 0.0
        %750 = vmatmul.mubr.f32.gmra.mrb[0].mxu0 %v538
        %v751 = vpop.f32.mrb[0].mxu0
        %v752 = vadd.f32 0.0, %v751
        %v753 = vpop.f32.mrb[0].mxu0
        %754 = vmatprep.mubr.f32.mxu0 0.0
        %755 = vmatmul.mubr.f32.gmra.mrb[0].mxu0 %v543
        %v756 = vpop.f32.mrb[0].mxu0
        %v757 = vadd.f32 0.0, %v756
        %v758 = vpop.f32.mrb[0].mxu0
        %759 = vmatprep.mubr.f32.mxu0 0.0
        %760 = vmatmul.mubr.f32.gmra.mrb[0].mxu0 %v546
        %v761 = vpop.f32.mrb[0].mxu0
        %v762 = vadd.f32 0.0, %v761
        %v763 = vpop.f32.mrb[0].mxu0
        %764 = vmatprep.mubr.f32.mxu0 0.0
        %765 = vmatmul.mubr.f32.gmra.mrb[0].mxu0 %v551
        %v766 = vpop.f32.mrb[0].mxu0
        %v767 = vadd.f32 0.0, %v766
        %v768 = vpop.f32.mrb[0].mxu0
        %769 = vmatprep.mubr.f32.mxu0 0.0
        %770 = vmatmul.mubr.f32.gmra.mrb[0].mxu0 %v554
        %v771 = vpop.f32.mrb[0].mxu0
        %v772 = vadd.f32 0.0, %v771
        %v773 = vpop.f32.mrb[0].mxu0
        %774 = vmatprep.mubr.f32.mxu0 0.0
        %775 = vmatmul.mubr.f32.gmra.mrb[0].mxu0 %v559
        %v776 = vpop.f32.mrb[0].mxu0
        %v777 = vadd.f32 0.0, %v776
        %v778 = vpop.f32.mrb[0].mxu0
        %779 = vmatprep.mubr.f32.mxu0 0.0
        %780 = vmatmul.mubr.f32.gmra.mrb[0].mxu0 %v562
        %v781 = vpop.f32.mrb[0].mxu0
        %v782 = vadd.f32 0.0, %v781
        %v783 = vpop.f32.mrb[0].mxu0
        %784 = vmatprep.mubr.f32.mxu0 0.0
        %785 = vmatmul.mubr.f32.gmra.mrb[0].mxu0 %v567
        %v786 = vpop.f32.mrb[0].mxu0
        %v787 = vadd.f32 0.0, %v786
        %v788 = vpop.f32.mrb[0].mxu0
        %789 = vmatprep.mubr.f32.mxu0 0.0
        %790 = vmatmul.mubr.f32.gmra.mrb[0].mxu0 %v570
        %v791 = vpop.f32.mrb[0].mxu0
        %v792 = vadd.f32 0.0, %v791
        %v793 = vpop.f32.mrb[0].mxu0
        %794 = vmatprep.mubr.f32.mxu0 0.0
        %795 = vmatmul.mubr.f32.gmra.mrb[0].mxu0 %v575
        %v796 = vpop.f32.mrb[0].mxu0
        %v797 = vadd.f32 0.0, %v796
        %v798 = vpop.f32.mrb[0].mxu0
        %799 = vmatprep.mubr.f32.mxu0 0.0
        %800 = vmatmul.mubr.f32.gmra.mrb[0].mxu0 %v578
        %v801 = vpop.f32.mrb[0].mxu0
        %v802 = vadd.f32 0.0, %v801
        %v803 = vpop.f32.mrb[0].mxu0
        %804 = vmatprep.mubr.f32.mxu0 0.0
        %805 = vmatmul.mubr.f32.gmra.mrb[0].mxu0 %v583
        %v806 = vpop.f32.mrb[0].mxu0
        %v807 = vadd.f32 0.0, %v806
        %v808 = vpop.f32.mrb[0].mxu0
        %809 = vmatprep.mubr.f32.mxu0 0.0
        %810 = vmatmul.mubr.f32.gmra.mrb[0].mxu0 %v586
        %v811 = vpop.f32.mrb[0].mxu0
        %v812 = vadd.f32 0.0, %v811
        %v813 = vpop.f32.mrb[0].mxu0
        %814 = vmatprep.mubr.f32.mxu0 0.0
        %815 = vmatmul.mubr.f32.gmra.mrb[0].mxu0 %v591
        %v816 = vpop.f32.mrb[0].mxu0
        %v817 = vadd.f32 0.0, %v816
        %v818 = vpop.f32.mrb[0].mxu0
        %819 = vmatprep.mubr.f32.mxu0 0.0
        %820 = vmatmul.mubr.f32.gmra.mrb[0].mxu0 %v594
        %v821 = vpop.f32.mrb[0].mxu0
        %v822 = vadd.f32 0.0, %v821
        %v823 = vpop.f32.mrb[0].mxu0
        %824 = vmatprep.mubr.f32.mxu0 0.0
        %825 = vmatmul.mubr.f32.gmra.mrb[0].mxu0 %v599
        %v826 = vpop.f32.mrb[0].mxu0
        %v827 = vadd.f32 0.0, %v826
        %v828 = vpop.f32.mrb[0].mxu0
        %829 = vmatprep.mubr.f32.mxu0 0.0
        %830 = vmatmul.mubr.f32.gmra.mrb[0].mxu0 %v602
        %v831 = vpop.f32.mrb[0].mxu0
        %v832 = vadd.f32 0.0, %v831
        %v833 = vpop.f32.mrb[0].mxu0
        %834 = vmatprep.mubr.f32.mxu0 0.0
        %835 = vmatmul.mubr.f32.gmra.mrb[0].mxu0 %v607
        %v836 = vpop.f32.mrb[0].mxu0
        %v837 = vadd.f32 0.0, %v836
        %v838 = vpop.f32.mrb[0].mxu0
        %839 = vmatprep.mubr.f32.mxu0 0.0
        %840 = vmatmul.mubr.f32.gmra.mrb[0].mxu0 %v610
        %v841 = vpop.f32.mrb[0].mxu0
        %v842 = vadd.f32 0.0, %v841
        %v843 = vpop.f32.mrb[0].mxu0
        %844 = vmatprep.mubr.f32.mxu0 0.0
        %845 = vmatmul.mubr.f32.gmra.mrb[0].mxu0 %v615
        %v846 = vpop.f32.mrb[0].mxu0
        %v847 = vadd.f32 0.0, %v846
        %v848 = vpop.f32.mrb[0].mxu0
        %849 = vmatprep.mubr.f32.mxu0 0.0
        %850 = vmatmul.mubr.f32.gmra.mrb[0].mxu0 %v618
        %v851 = vpop.f32.mrb[0].mxu0
        %v852 = vadd.f32 0.0, %v851
        %v853 = vpop.f32.mrb[0].mxu0
        %854 = vmatprep.mubr.f32.mxu0 0.0
        %855 = vmatmul.mubr.f32.gmra.mrb[0].mxu0 %v623
        %v856 = vpop.f32.mrb[0].mxu0
        %v857 = vadd.f32 0.0, %v856
        %v858 = vpop.f32.mrb[0].mxu0
        %859 = vmatprep.mubr.f32.mxu0 0.0
        %860 = vmatmul.mubr.f32.gmra.mrb[0].mxu0 %v626
        %v861 = vpop.f32.mrb[0].mxu0
        %v862 = vadd.f32 0.0, %v861
        %v863 = vpop.f32.mrb[0].mxu0
        %864 = vmatprep.mubr.f32.mxu0 0.0
        %865 = vmatmul.mubr.f32.gmra.mrb[0].mxu0 %v631
        %v866 = vpop.f32.mrb[0].mxu0
        %v867 = vadd.f32 0.0, %v866
        %v868 = vpop.f32.mrb[0].mxu0
        %869 = vmatprep.mubr.f32.mxu0 0.0
        %870 = vmatmul.mubr.f32.gmra.mrb[0].mxu0 %v634
        %v871 = vpop.f32.mrb[0].mxu0
        %v872 = vadd.f32 0.0, %v871
        %v873 = vpop.f32.mrb[0].mxu0
        %874 = vmatprep.mubr.f32.mxu0 0.0
        %875 = vmatmul.mubr.f32.gmra.mrb[0].mxu0 %v639
        %v876 = vpop.f32.mrb[0].mxu0
        %v877 = vadd.f32 0.0, %v876
        %v878 = vpop.f32.mrb[0].mxu0
        %879 = vmatprep.mubr.f32.mxu0 0.0
        %880 = vmatmul.mubr.f32.gmra.mrb[0].mxu0 %v642
        %v881 = vpop.f32.mrb[0].mxu0
        %v882 = vadd.f32 0.0, %v881
        %v883 = vpop.f32.mrb[0].mxu0
        %884 = vmatprep.mubr.f32.mxu0 0.0
        %885 = vmatmul.mubr.f32.gmra.mrb[0].mxu0 %v647
        %v886 = vpop.f32.mrb[0].mxu0
        %v887 = vadd.f32 0.0, %v886
        %v888 = vpop.f32.mrb[0].mxu0
        %889 = vmatprep.mubr.f32.mxu0 0.0
        %890 = vmatmul.mubr.f32.gmra.mrb[0].mxu0 %v650
        %v891 = vpop.f32.mrb[0].mxu0
        %v892 = vadd.f32 0.0, %v891
        %v893 = vpop.f32.mrb[0].mxu0
        %894 = vdwg.mxu0
        %v896 = vsel %vm439, %v737, 0
        %v899 = vsel %vm439, %v742, 0
        %v902 = vsel %vm439, %v747, 0
        %v905 = vsel %vm439, %v752, 0
        %v908 = vsel %vm439, %v757, 0
        %v911 = vsel %vm439, %v762, 0
        %v914 = vsel %vm439, %v767, 0
        %v917 = vsel %vm439, %v772, 0
        %v920 = vsel %vm439, %v777, 0
        %v923 = vsel %vm439, %v782, 0
        %v926 = vsel %vm439, %v787, 0
        %v929 = vsel %vm439, %v792, 0
        %v932 = vsel %vm439, %v797, 0
        %v935 = vsel %vm439, %v802, 0
        %v938 = vsel %vm439, %v807, 0
        %v941 = vsel %vm439, %v812, 0
        %v944 = vsel %vm439, %v817, 0
        %v947 = vsel %vm439, %v822, 0
        %v950 = vsel %vm439, %v827, 0
        %v953 = vsel %vm439, %v832, 0
        %v956 = vsel %vm439, %v837, 0
        %v959 = vsel %vm439, %v842, 0
        %v962 = vsel %vm439, %v847, 0
        %v965 = vsel %vm439, %v852, 0
        %v968 = vsel %vm439, %v857, 0
        %v971 = vsel %vm439, %v862, 0
        %v974 = vsel %vm439, %v867, 0
        %v977 = vsel %vm439, %v872, 0
        %v980 = vsel %vm439, %v877, 0
        %v983 = vsel %vm439, %v882, 0
        %v986 = vsel %vm439, %v887, 0
        %v989 = vsel %vm439, %v892, 0
        %vm991 = vcmask 1043456
        %v993 = vsel %vm991, %v669, 0
        %995 = vmatprep.subr.mxu0 0.0
        %996 = vmatpush1.msra.mxu0 %v993
        %997 = vmatprep.subr.mxu0 0.0
        %998 = vmatpush1.msra.mxu0 0.0
        %999 = vmatprep.subr.mxu0 0.0
        %1000 = vmatpush1.msra.mxu0 0.0
        %1001 = vmatprep.subr.mxu0 0.0
        %1002 = vmatpush1.msra.mxu0 0.0
        %1003 = vmatprep.subr.mxu0 0.0
        %1004 = vmatpush1.msra.mxu0 0.0
        %1005 = vmatprep.subr.mxu0 0.0
        %1006 = vmatpush1.msra.mxu0 0.0
        %1007 = vmatprep.subr.mxu0 0.0
        %1008 = vmatpush1.msra.mxu0 0.0
        %1009 = vmatprep.subr.mxu0 0.0
        %1010 = vmatpush1.msra.mxu0 0.0
        %1011 = vmatprep.subr.mxu0 0.0
        %1012 = vmatpush1.msra.mxu0 0.0
        %1013 = vmatprep.subr.mxu0 0.0
        %1014 = vmatpush1.msra.mxu0 0.0
        %1015 = vmatprep.subr.mxu0 0.0
        %1016 = vmatpush1.msra.mxu0 0.0
        %1017 = vmatprep.subr.mxu0 0.0
        %1018 = vmatpush1.msra.mxu0 0.0
        %1019 = vmatprep.subr.mxu0 0.0
        %1020 = vmatpush1.msra.mxu0 0.0
        %1021 = vmatprep.subr.mxu0 0.0
        %1022 = vmatpush1.msra.mxu0 0.0
        %1023 = vmatprep.subr.mxu0 0.0
        %1024 = vmatpush1.msra.mxu0 0.0
        %1025 = vmatprep.subr.mxu0 0.0
        %1026 = vmatpush1.msra.mxu0 0.0
        %1027 = vmatprep.subr.mxu0 0.0
        %1028 = vmatpush1.msra.mxu0 0.0
        %1029 = vmatprep.subr.mxu0 0.0
        %1030 = vmatpush1.msra.mxu0 0.0
        %1031 = vmatprep.subr.mxu0 0.0
        %1032 = vmatpush1.msra.mxu0 0.0
        %1033 = vmatprep.subr.mxu0 0.0
        %1034 = vmatpush1.msra.mxu0 0.0
        %1035 = vmatprep.subr.mxu0 0.0
        %1036 = vmatpush1.msra.mxu0 0.0
        %1037 = vmatprep.subr.mxu0 0.0
        %1038 = vmatpush1.msra.mxu0 0.0
        %1039 = vmatprep.subr.mxu0 0.0
        %1040 = vmatpush1.msra.mxu0 0.0
        %1041 = vmatprep.subr.mxu0 0.0
        %1042 = vmatpush1.msra.mxu0 0.0
        %1043 = vmatprep.subr.mxu0 0.0
        %1044 = vmatpush1.msra.mxu0 0.0
        %1045 = vmatprep.subr.mxu0 0.0
        %1046 = vmatpush1.msra.mxu0 0.0
        %1047 = vmatprep.subr.mxu0 0.0
        %1048 = vmatpush1.msra.mxu0 0.0
        %1049 = vmatprep.subr.mxu0 0.0
        %1050 = vmatpush1.msra.mxu0 0.0
        %1051 = vmatprep.subr.mxu0 0.0
        %1052 = vmatpush1.msra.mxu0 0.0
        %1053 = vmatprep.subr.mxu0 0.0
        %1054 = vmatpush1.msra.mxu0 0.0
        %1055 = vmatprep.subr.mxu0 0.0
        %1056 = vmatpush1.msra.mxu0 0.0
        %1057 = vmatprep.subr.mxu0 0.0
        %1058 = vmatpush1.msra.mxu0 0.0
        %1059 = vmatprep.mubr.f32.mxu0 0.0
        %1060 = vmatmul.mubr.f32.gmra.mrb[0].mxu0 %v896
        %v1061 = vpop.f32.mrb[0].mxu0
        %v1062 = vadd.f32 0.0, %v1061
        %v1063 = vpop.f32.mrb[0].mxu0
        %1064 = vmatprep.mubr.f32.mxu0 0.0
        %1065 = vmatmul.mubr.f32.gmra.mrb[0].mxu0 %v899
        %v1066 = vpop.f32.mrb[0].mxu0
        %v1067 = vadd.f32 0.0, %v1066
        %v1068 = vpop.f32.mrb[0].mxu0
        %1069 = vmatprep.mubr.f32.mxu0 0.0
        %1070 = vmatmul.mubr.f32.gmra.mrb[0].mxu0 %v902
        %v1071 = vpop.f32.mrb[0].mxu0
        %v1072 = vadd.f32 0.0, %v1071
        %v1073 = vpop.f32.mrb[0].mxu0
        %1074 = vmatprep.mubr.f32.mxu0 0.0
        %1075 = vmatmul.mubr.f32.gmra.mrb[0].mxu0 %v905
        %v1076 = vpop.f32.mrb[0].mxu0
        %v1077 = vadd.f32 0.0, %v1076
        %v1078 = vpop.f32.mrb[0].mxu0
        %1079 = vmatprep.mubr.f32.mxu0 0.0
        %1080 = vmatmul.mubr.f32.gmra.mrb[0].mxu0 %v908
        %v1081 = vpop.f32.mrb[0].mxu0
        %v1082 = vadd.f32 0.0, %v1081
        %v1083 = vpop.f32.mrb[0].mxu0
        %1084 = vmatprep.mubr.f32.mxu0 0.0
        %1085 = vmatmul.mubr.f32.gmra.mrb[0].mxu0 %v911
        %v1086 = vpop.f32.mrb[0].mxu0
        %v1087 = vadd.f32 0.0, %v1086
        %v1088 = vpop.f32.mrb[0].mxu0
        %1089 = vmatprep.mubr.f32.mxu0 0.0
        %1090 = vmatmul.mubr.f32.gmra.mrb[0].mxu0 %v914
        %v1091 = vpop.f32.mrb[0].mxu0
        %v1092 = vadd.f32 0.0, %v1091
        %v1093 = vpop.f32.mrb[0].mxu0
        %1094 = vmatprep.mubr.f32.mxu0 0.0
        %1095 = vmatmul.mubr.f32.gmra.mrb[0].mxu0 %v917
        %v1096 = vpop.f32.mrb[0].mxu0
        %v1097 = vadd.f32 0.0, %v1096
        %v1098 = vpop.f32.mrb[0].mxu0
        %1099 = vmatprep.mubr.f32.mxu0 0.0
        %1100 = vmatmul.mubr.f32.gmra.mrb[0].mxu0 %v920
        %v1101 = vpop.f32.mrb[0].mxu0
        %v1102 = vadd.f32 0.0, %v1101
        %v1103 = vpop.f32.mrb[0].mxu0
        %1104 = vmatprep.mubr.f32.mxu0 0.0
        %1105 = vmatmul.mubr.f32.gmra.mrb[0].mxu0 %v923
        %v1106 = vpop.f32.mrb[0].mxu0
        %v1107 = vadd.f32 0.0, %v1106
        %v1108 = vpop.f32.mrb[0].mxu0
        %1109 = vmatprep.mubr.f32.mxu0 0.0
        %1110 = vmatmul.mubr.f32.gmra.mrb[0].mxu0 %v926
        %v1111 = vpop.f32.mrb[0].mxu0
        %v1112 = vadd.f32 0.0, %v1111
        %v1113 = vpop.f32.mrb[0].mxu0
        %1114 = vmatprep.mubr.f32.mxu0 0.0
        %1115 = vmatmul.mubr.f32.gmra.mrb[0].mxu0 %v929
        %v1116 = vpop.f32.mrb[0].mxu0
        %v1117 = vadd.f32 0.0, %v1116
        %v1118 = vpop.f32.mrb[0].mxu0
        %1119 = vmatprep.mubr.f32.mxu0 0.0
        %1120 = vmatmul.mubr.f32.gmra.mrb[0].mxu0 %v932
        %v1121 = vpop.f32.mrb[0].mxu0
        %v1122 = vadd.f32 0.0, %v1121
        %v1123 = vpop.f32.mrb[0].mxu0
        %1124 = vmatprep.mubr.f32.mxu0 0.0
        %1125 = vmatmul.mubr.f32.gmra.mrb[0].mxu0 %v935
        %v1126 = vpop.f32.mrb[0].mxu0
        %v1127 = vadd.f32 0.0, %v1126
        %v1128 = vpop.f32.mrb[0].mxu0
        %1129 = vmatprep.mubr.f32.mxu0 0.0
        %1130 = vmatmul.mubr.f32.gmra.mrb[0].mxu0 %v938
        %v1131 = vpop.f32.mrb[0].mxu0
        %v1132 = vadd.f32 0.0, %v1131
        %v1133 = vpop.f32.mrb[0].mxu0
        %1134 = vmatprep.mubr.f32.mxu0 0.0
        %1135 = vmatmul.mubr.f32.gmra.mrb[0].mxu0 %v941
        %v1136 = vpop.f32.mrb[0].mxu0
        %v1137 = vadd.f32 0.0, %v1136
        %v1138 = vpop.f32.mrb[0].mxu0
        %1139 = vmatprep.mubr.f32.mxu0 0.0
        %1140 = vmatmul.mubr.f32.gmra.mrb[0].mxu0 %v944
        %v1141 = vpop.f32.mrb[0].mxu0
        %v1142 = vadd.f32 0.0, %v1141
        %v1143 = vpop.f32.mrb[0].mxu0
        %1144 = vmatprep.mubr.f32.mxu0 0.0
        %1145 = vmatmul.mubr.f32.gmra.mrb[0].mxu0 %v947
        %v1146 = vpop.f32.mrb[0].mxu0
        %v1147 = vadd.f32 0.0, %v1146
        %v1148 = vpop.f32.mrb[0].mxu0
        %1149 = vmatprep.mubr.f32.mxu0 0.0
        %1150 = vmatmul.mubr.f32.gmra.mrb[0].mxu0 %v950
        %v1151 = vpop.f32.mrb[0].mxu0
        %v1152 = vadd.f32 0.0, %v1151
        %v1153 = vpop.f32.mrb[0].mxu0
        %1154 = vmatprep.mubr.f32.mxu0 0.0
        %1155 = vmatmul.mubr.f32.gmra.mrb[0].mxu0 %v953
        %v1156 = vpop.f32.mrb[0].mxu0
        %v1157 = vadd.f32 0.0, %v1156
        %v1158 = vpop.f32.mrb[0].mxu0
        %1159 = vmatprep.mubr.f32.mxu0 0.0
        %1160 = vmatmul.mubr.f32.gmra.mrb[0].mxu0 %v956
        %v1161 = vpop.f32.mrb[0].mxu0
        %v1162 = vadd.f32 0.0, %v1161
        %v1163 = vpop.f32.mrb[0].mxu0
        %1164 = vmatprep.mubr.f32.mxu0 0.0
        %1165 = vmatmul.mubr.f32.gmra.mrb[0].mxu0 %v959
        %v1166 = vpop.f32.mrb[0].mxu0
        %v1167 = vadd.f32 0.0, %v1166
        %v1168 = vpop.f32.mrb[0].mxu0
        %1169 = vmatprep.mubr.f32.mxu0 0.0
        %1170 = vmatmul.mubr.f32.gmra.mrb[0].mxu0 %v962
        %v1171 = vpop.f32.mrb[0].mxu0
        %v1172 = vadd.f32 0.0, %v1171
        %v1173 = vpop.f32.mrb[0].mxu0
        %1174 = vmatprep.mubr.f32.mxu0 0.0
        %1175 = vmatmul.mubr.f32.gmra.mrb[0].mxu0 %v965
        %v1176 = vpop.f32.mrb[0].mxu0
        %v1177 = vadd.f32 0.0, %v1176
        %v1178 = vpop.f32.mrb[0].mxu0
        %1179 = vmatprep.mubr.f32.mxu0 0.0
        %1180 = vmatmul.mubr.f32.gmra.mrb[0].mxu0 %v968
        %v1181 = vpop.f32.mrb[0].mxu0
        %v1182 = vadd.f32 0.0, %v1181
        %v1183 = vpop.f32.mrb[0].mxu0
        %1184 = vmatprep.mubr.f32.mxu0 0.0
        %1185 = vmatmul.mubr.f32.gmra.mrb[0].mxu0 %v971
        %v1186 = vpop.f32.mrb[0].mxu0
        %v1187 = vadd.f32 0.0, %v1186
        %v1188 = vpop.f32.mrb[0].mxu0
        %1189 = vmatprep.mubr.f32.mxu0 0.0
        %1190 = vmatmul.mubr.f32.gmra.mrb[0].mxu0 %v974
        %v1191 = vpop.f32.mrb[0].mxu0
        %v1192 = vadd.f32 0.0, %v1191
        %v1193 = vpop.f32.mrb[0].mxu0
        %1194 = vmatprep.mubr.f32.mxu0 0.0
        %1195 = vmatmul.mubr.f32.gmra.mrb[0].mxu0 %v977
        %v1196 = vpop.f32.mrb[0].mxu0
        %v1197 = vadd.f32 0.0, %v1196
        %v1198 = vpop.f32.mrb[0].mxu0
        %1199 = vmatprep.mubr.f32.mxu0 0.0
        %1200 = vmatmul.mubr.f32.gmra.mrb[0].mxu0 %v980
        %v1201 = vpop.f32.mrb[0].mxu0
        %v1202 = vadd.f32 0.0, %v1201
        %v1203 = vpop.f32.mrb[0].mxu0
        %1204 = vmatprep.mubr.f32.mxu0 0.0
        %1205 = vmatmul.mubr.f32.gmra.mrb[0].mxu0 %v983
        %v1206 = vpop.f32.mrb[0].mxu0
        %v1207 = vadd.f32 0.0, %v1206
        %v1208 = vpop.f32.mrb[0].mxu0
        %1209 = vmatprep.mubr.f32.mxu0 0.0
        %1210 = vmatmul.mubr.f32.gmra.mrb[0].mxu0 %v986
        %v1211 = vpop.f32.mrb[0].mxu0
        %v1212 = vadd.f32 0.0, %v1211
        %v1213 = vpop.f32.mrb[0].mxu0
        %1214 = vmatprep.mubr.f32.mxu0 0.0
        %1215 = vmatmul.mubr.f32.gmra.mrb[0].mxu0 %v989
        %v1216 = vpop.f32.mrb[0].mxu0
        %v1217 = vadd.f32 0.0, %v1216
        %v1218 = vpop.f32.mrb[0].mxu0
        %1219 = vdwg.mxu0
        %v1220 = vsub.f32 %v527, %v1062
        %v1221 = vsub.f32 %v530, %v1067
        %v1222 = vsub.f32 %v535, %v1072
        %v1223 = vsub.f32 %v538, %v1077
        %v1224 = vsub.f32 %v543, %v1082
        %v1225 = vsub.f32 %v546, %v1087
        %v1226 = vsub.f32 %v551, %v1092
        %v1227 = vsub.f32 %v554, %v1097
        %v1228 = vsub.f32 %v559, %v1102
        %v1229 = vsub.f32 %v562, %v1107
        %v1230 = vsub.f32 %v567, %v1112
        %v1231 = vsub.f32 %v570, %v1117
        %v1232 = vsub.f32 %v575, %v1122
        %v1233 = vsub.f32 %v578, %v1127
        %v1234 = vsub.f32 %v583, %v1132
        %v1235 = vsub.f32 %v586, %v1137
        %v1236 = vsub.f32 %v591, %v1142
        %v1237 = vsub.f32 %v594, %v1147
        %v1238 = vsub.f32 %v599, %v1152
        %v1239 = vsub.f32 %v602, %v1157
        %v1240 = vsub.f32 %v607, %v1162
        %v1241 = vsub.f32 %v610, %v1167
        %v1242 = vsub.f32 %v615, %v1172
        %v1243 = vsub.f32 %v618, %v1177
        %v1244 = vsub.f32 %v623, %v1182
        %v1245 = vsub.f32 %v626, %v1187
        %v1246 = vsub.f32 %v631, %v1192
        %v1247 = vsub.f32 %v634, %v1197
        %v1248 = vsub.f32 %v639, %v1202
        %v1249 = vsub.f32 %v642, %v1207
        %v1250 = vsub.f32 %v647, %v1212
        %v1251 = vsub.f32 %v650, %v1217
        %v1252 = vmul.f32 %v1220, %v1220
        %v1253 = vmul.f32 %v1221, %v1221
        %v1254 = vmul.f32 %v1222, %v1222
        %v1255 = vmul.f32 %v1223, %v1223
        %v1256 = vmul.f32 %v1224, %v1224
        %v1257 = vmul.f32 %v1225, %v1225
        %v1258 = vmul.f32 %v1226, %v1226
        %v1259 = vmul.f32 %v1227, %v1227
        %v1260 = vmul.f32 %v1228, %v1228
        %v1261 = vmul.f32 %v1229, %v1229
        %v1262 = vmul.f32 %v1230, %v1230
        %v1263 = vmul.f32 %v1231, %v1231
        %v1264 = vmul.f32 %v1232, %v1232
        %v1265 = vmul.f32 %v1233, %v1233
        %v1266 = vmul.f32 %v1234, %v1234
        %v1267 = vmul.f32 %v1235, %v1235
        %v1268 = vmul.f32 %v1236, %v1236
        %v1269 = vmul.f32 %v1237, %v1237
        %v1270 = vmul.f32 %v1238, %v1238
        %v1271 = vmul.f32 %v1239, %v1239
        %v1272 = vmul.f32 %v1240, %v1240
        %v1273 = vmul.f32 %v1241, %v1241
        %v1274 = vmul.f32 %v1242, %v1242
        %v1275 = vmul.f32 %v1243, %v1243
        %v1276 = vmul.f32 %v1244, %v1244
        %v1277 = vmul.f32 %v1245, %v1245
        %v1278 = vmul.f32 %v1246, %v1246
        %v1279 = vmul.f32 %v1247, %v1247
        %v1280 = vmul.f32 %v1248, %v1248
        %v1281 = vmul.f32 %v1249, %v1249
        %v1282 = vmul.f32 %v1250, %v1250
        %v1283 = vmul.f32 %v1251, %v1251
        %1284 = vmatprep.subr.mxu0 0.0
        %1285 = vmatpush1.msra.mxu0 %v653
        %1286 = vmatprep.subr.mxu0 0.0
        %1287 = vmatpush1.msra.mxu0 %v654
        %1288 = vmatprep.subr.mxu0 0.0
        %1289 = vmatpush1.msra.mxu0 %v655
        %1290 = vmatprep.subr.mxu0 0.0
        %1291 = vmatpush1.msra.mxu0 %v656
        %1292 = vmatprep.subr.mxu0 0.0
        %1293 = vmatpush1.msra.mxu0 %v657
        %1294 = vmatprep.subr.mxu0 0.0
        %1295 = vmatpush1.msra.mxu0 %v658
        %1296 = vmatprep.subr.mxu0 0.0
        %1297 = vmatpush1.msra.mxu0 %v659
        %1298 = vmatprep.subr.mxu0 0.0
        %1299 = vmatpush1.msra.mxu0 %v660
        %1300 = vmatprep.subr.mxu0 0.0
        %1301 = vmatpush1.msra.mxu0 %v661
        %1302 = vmatprep.subr.mxu0 0.0
        %1303 = vmatpush1.msra.mxu0 %v662
        %1304 = vmatprep.subr.mxu0 0.0
        %1305 = vmatpush1.msra.mxu0 %v663
        %1306 = vmatprep.subr.mxu0 0.0
        %1307 = vmatpush1.msra.mxu0 %v664
        %1308 = vmatprep.subr.mxu0 0.0
        %1309 = vmatpush1.msra.mxu0 %v665
        %1310 = vmatprep.subr.mxu0 0.0
        %1311 = vmatpush1.msra.mxu0 %v666
        %1312 = vmatprep.subr.mxu0 0.0
        %1313 = vmatpush1.msra.mxu0 %v667
        %1314 = vmatprep.subr.mxu0 0.0
        %1315 = vmatpush1.msra.mxu0 %v668
        %1316 = vmatprep.subr.mxu0 0.0
        %1317 = vmatpush1.msra.mxu0 0.0
        %1318 = vmatprep.subr.mxu0 0.0
        %1319 = vmatpush1.msra.mxu0 0.0
        %1320 = vmatprep.subr.mxu0 0.0
        %1321 = vmatpush1.msra.mxu0 0.0
        %1322 = vmatprep.subr.mxu0 0.0
        %1323 = vmatpush1.msra.mxu0 0.0
        %1324 = vmatprep.subr.mxu0 0.0
        %1325 = vmatpush1.msra.mxu0 0.0
        %1326 = vmatprep.subr.mxu0 0.0
        %1327 = vmatpush1.msra.mxu0 0.0
        %1328 = vmatprep.subr.mxu0 0.0
        %1329 = vmatpush1.msra.mxu0 0.0
        %1330 = vmatprep.subr.mxu0 0.0
        %1331 = vmatpush1.msra.mxu0 0.0
        %1332 = vmatprep.subr.mxu0 0.0
        %1333 = vmatpush1.msra.mxu0 0.0
        %1334 = vmatprep.subr.mxu0 0.0
        %1335 = vmatpush1.msra.mxu0 0.0
        %1336 = vmatprep.subr.mxu0 0.0
        %1337 = vmatpush1.msra.mxu0 0.0
        %1338 = vmatprep.subr.mxu0 0.0
        %1339 = vmatpush1.msra.mxu0 0.0
        %1340 = vmatprep.subr.mxu0 0.0
        %1341 = vmatpush1.msra.mxu0 0.0
        %1342 = vmatprep.subr.mxu0 0.0
        %1343 = vmatpush1.msra.mxu0 0.0
        %1344 = vmatprep.subr.mxu0 0.0
        %1345 = vmatpush1.msra.mxu0 0.0
        %1346 = vmatprep.subr.mxu0 0.0
        %1347 = vmatpush1.msra.mxu0 0.0
        %1348 = vmatprep.mubr.f32.mxu0 0.0
        %1349 = vmatmul.mubr.f32.gmra.mrb[0].mxu0 %v1252
        %v1350 = vpop.f32.mrb[0].mxu0
        %v1351 = vadd.f32 0.0, %v1350
        %v1352 = vpop.f32.mrb[0].mxu0
        %1353 = vmatprep.mubr.f32.mxu0 0.0
        %1354 = vmatmul.mubr.f32.gmra.mrb[0].mxu0 %v1253
        %v1355 = vpop.f32.mrb[0].mxu0
        %v1356 = vadd.f32 0.0, %v1355
        %v1357 = vpop.f32.mrb[0].mxu0
        %1358 = vmatprep.mubr.f32.mxu0 0.0
        %1359 = vmatmul.mubr.f32.gmra.mrb[0].mxu0 %v1254
        %v1360 = vpop.f32.mrb[0].mxu0
        %v1361 = vadd.f32 0.0, %v1360
        %v1362 = vpop.f32.mrb[0].mxu0
        %1363 = vmatprep.mubr.f32.mxu0 0.0
        %1364 = vmatmul.mubr.f32.gmra.mrb[0].mxu0 %v1255
        %v1365 = vpop.f32.mrb[0].mxu0
        %v1366 = vadd.f32 0.0, %v1365
        %v1367 = vpop.f32.mrb[0].mxu0
        %1368 = vmatprep.mubr.f32.mxu0 0.0
        %1369 = vmatmul.mubr.f32.gmra.mrb[0].mxu0 %v1256
        %v1370 = vpop.f32.mrb[0].mxu0
        %v1371 = vadd.f32 0.0, %v1370
        %v1372 = vpop.f32.mrb[0].mxu0
        %1373 = vmatprep.mubr.f32.mxu0 0.0
        %1374 = vmatmul.mubr.f32.gmra.mrb[0].mxu0 %v1257
        %v1375 = vpop.f32.mrb[0].mxu0
        %v1376 = vadd.f32 0.0, %v1375
        %v1377 = vpop.f32.mrb[0].mxu0
        %1378 = vmatprep.mubr.f32.mxu0 0.0
        %1379 = vmatmul.mubr.f32.gmra.mrb[0].mxu0 %v1258
        %v1380 = vpop.f32.mrb[0].mxu0
        %v1381 = vadd.f32 0.0, %v1380
        %v1382 = vpop.f32.mrb[0].mxu0
        %1383 = vmatprep.mubr.f32.mxu0 0.0
        %1384 = vmatmul.mubr.f32.gmra.mrb[0].mxu0 %v1259
        %v1385 = vpop.f32.mrb[0].mxu0
        %v1386 = vadd.f32 0.0, %v1385
        %v1387 = vpop.f32.mrb[0].mxu0
        %1388 = vmatprep.mubr.f32.mxu0 0.0
        %1389 = vmatmul.mubr.f32.gmra.mrb[0].mxu0 %v1260
        %v1390 = vpop.f32.mrb[0].mxu0
        %v1391 = vadd.f32 0.0, %v1390
        %v1392 = vpop.f32.mrb[0].mxu0
        %1393 = vmatprep.mubr.f32.mxu0 0.0
        %1394 = vmatmul.mubr.f32.gmra.mrb[0].mxu0 %v1261
        %v1395 = vpop.f32.mrb[0].mxu0
        %v1396 = vadd.f32 0.0, %v1395
        %v1397 = vpop.f32.mrb[0].mxu0
        %1398 = vmatprep.mubr.f32.mxu0 0.0
        %1399 = vmatmul.mubr.f32.gmra.mrb[0].mxu0 %v1262
        %v1400 = vpop.f32.mrb[0].mxu0
        %v1401 = vadd.f32 0.0, %v1400
        %v1402 = vpop.f32.mrb[0].mxu0
        %1403 = vmatprep.mubr.f32.mxu0 0.0
        %1404 = vmatmul.mubr.f32.gmra.mrb[0].mxu0 %v1263
        %v1405 = vpop.f32.mrb[0].mxu0
        %v1406 = vadd.f32 0.0, %v1405
        %v1407 = vpop.f32.mrb[0].mxu0
        %1408 = vmatprep.mubr.f32.mxu0 0.0
        %1409 = vmatmul.mubr.f32.gmra.mrb[0].mxu0 %v1264
        %v1410 = vpop.f32.mrb[0].mxu0
        %v1411 = vadd.f32 0.0, %v1410
        %v1412 = vpop.f32.mrb[0].mxu0
        %1413 = vmatprep.mubr.f32.mxu0 0.0
        %1414 = vmatmul.mubr.f32.gmra.mrb[0].mxu0 %v1265
        %v1415 = vpop.f32.mrb[0].mxu0
        %v1416 = vadd.f32 0.0, %v1415
        %v1417 = vpop.f32.mrb[0].mxu0
        %1418 = vmatprep.mubr.f32.mxu0 0.0
        %1419 = vmatmul.mubr.f32.gmra.mrb[0].mxu0 %v1266
        %v1420 = vpop.f32.mrb[0].mxu0
        %v1421 = vadd.f32 0.0, %v1420
        %v1422 = vpop.f32.mrb[0].mxu0
        %1423 = vmatprep.mubr.f32.mxu0 0.0
        %1424 = vmatmul.mubr.f32.gmra.mrb[0].mxu0 %v1267
        %v1425 = vpop.f32.mrb[0].mxu0
        %v1426 = vadd.f32 0.0, %v1425
        %v1427 = vpop.f32.mrb[0].mxu0
        %1428 = vmatprep.mubr.f32.mxu0 0.0
        %1429 = vmatmul.mubr.f32.gmra.mrb[0].mxu0 %v1268
        %v1430 = vpop.f32.mrb[0].mxu0
        %v1431 = vadd.f32 0.0, %v1430
        %v1432 = vpop.f32.mrb[0].mxu0
        %1433 = vmatprep.mubr.f32.mxu0 0.0
        %1434 = vmatmul.mubr.f32.gmra.mrb[0].mxu0 %v1269
        %v1435 = vpop.f32.mrb[0].mxu0
        %v1436 = vadd.f32 0.0, %v1435
        %v1437 = vpop.f32.mrb[0].mxu0
        %1438 = vmatprep.mubr.f32.mxu0 0.0
        %1439 = vmatmul.mubr.f32.gmra.mrb[0].mxu0 %v1270
        %v1440 = vpop.f32.mrb[0].mxu0
        %v1441 = vadd.f32 0.0, %v1440
        %v1442 = vpop.f32.mrb[0].mxu0
        %1443 = vmatprep.mubr.f32.mxu0 0.0
        %1444 = vmatmul.mubr.f32.gmra.mrb[0].mxu0 %v1271
        %v1445 = vpop.f32.mrb[0].mxu0
        %v1446 = vadd.f32 0.0, %v1445
        %v1447 = vpop.f32.mrb[0].mxu0
        %1448 = vmatprep.mubr.f32.mxu0 0.0
        %1449 = vmatmul.mubr.f32.gmra.mrb[0].mxu0 %v1272
        %v1450 = vpop.f32.mrb[0].mxu0
        %v1451 = vadd.f32 0.0, %v1450
        %v1452 = vpop.f32.mrb[0].mxu0
        %1453 = vmatprep.mubr.f32.mxu0 0.0
        %1454 = vmatmul.mubr.f32.gmra.mrb[0].mxu0 %v1273
        %v1455 = vpop.f32.mrb[0].mxu0
        %v1456 = vadd.f32 0.0, %v1455
        %v1457 = vpop.f32.mrb[0].mxu0
        %1458 = vmatprep.mubr.f32.mxu0 0.0
        %1459 = vmatmul.mubr.f32.gmra.mrb[0].mxu0 %v1274
        %v1460 = vpop.f32.mrb[0].mxu0
        %v1461 = vadd.f32 0.0, %v1460
        %v1462 = vpop.f32.mrb[0].mxu0
        %1463 = vmatprep.mubr.f32.mxu0 0.0
        %1464 = vmatmul.mubr.f32.gmra.mrb[0].mxu0 %v1275
        %v1465 = vpop.f32.mrb[0].mxu0
        %v1466 = vadd.f32 0.0, %v1465
        %v1467 = vpop.f32.mrb[0].mxu0
        %1468 = vmatprep.mubr.f32.mxu0 0.0
        %1469 = vmatmul.mubr.f32.gmra.mrb[0].mxu0 %v1276
        %v1470 = vpop.f32.mrb[0].mxu0
        %v1471 = vadd.f32 0.0, %v1470
        %v1472 = vpop.f32.mrb[0].mxu0
        %1473 = vmatprep.mubr.f32.mxu0 0.0
        %1474 = vmatmul.mubr.f32.gmra.mrb[0].mxu0 %v1277
        %v1475 = vpop.f32.mrb[0].mxu0
        %v1476 = vadd.f32 0.0, %v1475
        %v1477 = vpop.f32.mrb[0].mxu0
        %1478 = vmatprep.mubr.f32.mxu0 0.0
        %1479 = vmatmul.mubr.f32.gmra.mrb[0].mxu0 %v1278
        %v1480 = vpop.f32.mrb[0].mxu0
        %v1481 = vadd.f32 0.0, %v1480
        %v1482 = vpop.f32.mrb[0].mxu0
        %1483 = vmatprep.mubr.f32.mxu0 0.0
        %1484 = vmatmul.mubr.f32.gmra.mrb[0].mxu0 %v1279
        %v1485 = vpop.f32.mrb[0].mxu0
        %v1486 = vadd.f32 0.0, %v1485
        %v1487 = vpop.f32.mrb[0].mxu0
        %1488 = vmatprep.mubr.f32.mxu0 0.0
        %1489 = vmatmul.mubr.f32.gmra.mrb[0].mxu0 %v1280
        %v1490 = vpop.f32.mrb[0].mxu0
        %v1491 = vadd.f32 0.0, %v1490
        %v1492 = vpop.f32.mrb[0].mxu0
        %1493 = vmatprep.mubr.f32.mxu0 0.0
        %1494 = vmatmul.mubr.f32.gmra.mrb[0].mxu0 %v1281
        %v1495 = vpop.f32.mrb[0].mxu0
        %v1496 = vadd.f32 0.0, %v1495
        %v1497 = vpop.f32.mrb[0].mxu0
        %1498 = vmatprep.mubr.f32.mxu0 0.0
        %1499 = vmatmul.mubr.f32.gmra.mrb[0].mxu0 %v1282
        %v1500 = vpop.f32.mrb[0].mxu0
        %v1501 = vadd.f32 0.0, %v1500
        %v1502 = vpop.f32.mrb[0].mxu0
        %1503 = vmatprep.mubr.f32.mxu0 0.0
        %1504 = vmatmul.mubr.f32.gmra.mrb[0].mxu0 %v1283
        %v1505 = vpop.f32.mrb[0].mxu0
        %v1506 = vadd.f32 0.0, %v1505
        %v1507 = vpop.f32.mrb[0].mxu0
        %1508 = vdwg.mxu0
        %v1510 = vsel %vm439, %v1351, 0
        %v1513 = vsel %vm439, %v1356, 0
        %v1516 = vsel %vm439, %v1361, 0
        %v1519 = vsel %vm439, %v1366, 0
        %v1522 = vsel %vm439, %v1371, 0
        %v1525 = vsel %vm439, %v1376, 0
        %v1528 = vsel %vm439, %v1381, 0
        %v1531 = vsel %vm439, %v1386, 0
        %v1534 = vsel %vm439, %v1391, 0
        %v1537 = vsel %vm439, %v1396, 0
        %v1540 = vsel %vm439, %v1401, 0
        %v1543 = vsel %vm439, %v1406, 0
        %v1546 = vsel %vm439, %v1411, 0
        %v1549 = vsel %vm439, %v1416, 0
        %v1552 = vsel %vm439, %v1421, 0
        %v1555 = vsel %vm439, %v1426, 0
        %v1558 = vsel %vm439, %v1431, 0
        %v1561 = vsel %vm439, %v1436, 0
        %v1564 = vsel %vm439, %v1441, 0
        %v1567 = vsel %vm439, %v1446, 0
        %v1570 = vsel %vm439, %v1451, 0
        %v1573 = vsel %vm439, %v1456, 0
        %v1576 = vsel %vm439, %v1461, 0
        %v1579 = vsel %vm439, %v1466, 0
        %v1582 = vsel %vm439, %v1471, 0
        %v1585 = vsel %vm439, %v1476, 0
        %v1588 = vsel %vm439, %v1481, 0
        %v1591 = vsel %vm439, %v1486, 0
        %v1594 = vsel %vm439, %v1491, 0
        %v1597 = vsel %vm439, %v1496, 0
        %v1600 = vsel %vm439, %v1501, 0
        %v1603 = vsel %vm439, %v1506, 0
        %1605 = vmatprep.subr.mxu0 0.0
        %1606 = vmatpush1.msra.mxu0 %v993
        %1607 = vmatprep.subr.mxu0 0.0
        %1608 = vmatpush1.msra.mxu0 0.0
        %1609 = vmatprep.subr.mxu0 0.0
        %1610 = vmatpush1.msra.mxu0 0.0
        %1611 = vmatprep.subr.mxu0 0.0
        %1612 = vmatpush1.msra.mxu0 0.0
        %1613 = vmatprep.subr.mxu0 0.0
        %1614 = vmatpush1.msra.mxu0 0.0
        %1615 = vmatprep.subr.mxu0 0.0
        %1616 = vmatpush1.msra.mxu0 0.0
        %1617 = vmatprep.subr.mxu0 0.0
        %1618 = vmatpush1.msra.mxu0 0.0
        %1619 = vmatprep.subr.mxu0 0.0
        %1620 = vmatpush1.msra.mxu0 0.0
        %1621 = vmatprep.subr.mxu0 0.0
        %1622 = vmatpush1.msra.mxu0 0.0
        %1623 = vmatprep.subr.mxu0 0.0
        %1624 = vmatpush1.msra.mxu0 0.0
        %1625 = vmatprep.subr.mxu0 0.0
        %1626 = vmatpush1.msra.mxu0 0.0
        %1627 = vmatprep.subr.mxu0 0.0
        %1628 = vmatpush1.msra.mxu0 0.0
        %1629 = vmatprep.subr.mxu0 0.0
        %1630 = vmatpush1.msra.mxu0 0.0
        %1631 = vmatprep.subr.mxu0 0.0
        %1632 = vmatpush1.msra.mxu0 0.0
        %1633 = vmatprep.subr.mxu0 0.0
        %1634 = vmatpush1.msra.mxu0 0.0
        %1635 = vmatprep.subr.mxu0 0.0
        %1636 = vmatpush1.msra.mxu0 0.0
        %1637 = vmatprep.subr.mxu0 0.0
        %1638 = vmatpush1.msra.mxu0 0.0
        %1639 = vmatprep.subr.mxu0 0.0
        %1640 = vmatpush1.msra.mxu0 0.0
        %1641 = vmatprep.subr.mxu0 0.0
        %1642 = vmatpush1.msra.mxu0 0.0
        %1643 = vmatprep.subr.mxu0 0.0
        %1644 = vmatpush1.msra.mxu0 0.0
        %1645 = vmatprep.subr.mxu0 0.0
        %1646 = vmatpush1.msra.mxu0 0.0
        %1647 = vmatprep.subr.mxu0 0.0
        %1648 = vmatpush1.msra.mxu0 0.0
        %1649 = vmatprep.subr.mxu0 0.0
        %1650 = vmatpush1.msra.mxu0 0.0
        %1651 = vmatprep.subr.mxu0 0.0
        %1652 = vmatpush1.msra.mxu0 0.0
        %1653 = vmatprep.subr.mxu0 0.0
        %1654 = vmatpush1.msra.mxu0 0.0
        %1655 = vmatprep.subr.mxu0 0.0
        %1656 = vmatpush1.msra.mxu0 0.0
        %1657 = vmatprep.subr.mxu0 0.0
        %1658 = vmatpush1.msra.mxu0 0.0
        %1659 = vmatprep.subr.mxu0 0.0
        %1660 = vmatpush1.msra.mxu0 0.0
        %1661 = vmatprep.subr.mxu0 0.0
        %1662 = vmatpush1.msra.mxu0 0.0
        %1663 = vmatprep.subr.mxu0 0.0
        %1664 = vmatpush1.msra.mxu0 0.0
        %1665 = vmatprep.subr.mxu0 0.0
        %1666 = vmatpush1.msra.mxu0 0.0
        %1667 = vmatprep.subr.mxu0 0.0
        %1668 = vmatpush1.msra.mxu0 0.0
        %1669 = vmatprep.mubr.f32.mxu0 0.0
        %1670 = vmatmul.mubr.f32.gmra.mrb[0].mxu0 %v1510
        %v1671 = vpop.f32.mrb[0].mxu0
        %v1672 = vadd.f32 1e-05, %v1671
        %v1673 = vpop.f32.mrb[0].mxu0
        %1674 = vmatprep.mubr.f32.mxu0 0.0
        %1675 = vmatmul.mubr.f32.gmra.mrb[0].mxu0 %v1513
        %v1676 = vpop.f32.mrb[0].mxu0
        %v1677 = vadd.f32 1e-05, %v1676
        %v1678 = vpop.f32.mrb[0].mxu0
        %1679 = vmatprep.mubr.f32.mxu0 0.0
        %1680 = vmatmul.mubr.f32.gmra.mrb[0].mxu0 %v1516
        %v1681 = vpop.f32.mrb[0].mxu0
        %v1682 = vadd.f32 1e-05, %v1681
        %v1683 = vpop.f32.mrb[0].mxu0
        %1684 = vmatprep.mubr.f32.mxu0 0.0
        %1685 = vmatmul.mubr.f32.gmra.mrb[0].mxu0 %v1519
        %v1686 = vpop.f32.mrb[0].mxu0
        %v1687 = vadd.f32 1e-05, %v1686
        %v1688 = vpop.f32.mrb[0].mxu0
        %1689 = vmatprep.mubr.f32.mxu0 0.0
        %1690 = vmatmul.mubr.f32.gmra.mrb[0].mxu0 %v1522
        %v1691 = vpop.f32.mrb[0].mxu0
        %v1692 = vadd.f32 1e-05, %v1691
        %v1693 = vpop.f32.mrb[0].mxu0
        %1694 = vmatprep.mubr.f32.mxu0 0.0
        %1695 = vmatmul.mubr.f32.gmra.mrb[0].mxu0 %v1525
        %v1696 = vpop.f32.mrb[0].mxu0
        %v1697 = vadd.f32 1e-05, %v1696
        %v1698 = vpop.f32.mrb[0].mxu0
        %1699 = vmatprep.mubr.f32.mxu0 0.0
        %1700 = vmatmul.mubr.f32.gmra.mrb[0].mxu0 %v1528
        %v1701 = vpop.f32.mrb[0].mxu0
        %v1702 = vadd.f32 1e-05, %v1701
        %v1703 = vpop.f32.mrb[0].mxu0
        %1704 = vmatprep.mubr.f32.mxu0 0.0
        %1705 = vmatmul.mubr.f32.gmra.mrb[0].mxu0 %v1531
        %v1706 = vpop.f32.mrb[0].mxu0
        %v1707 = vadd.f32 1e-05, %v1706
        %v1708 = vpop.f32.mrb[0].mxu0
        %1709 = vmatprep.mubr.f32.mxu0 0.0
        %1710 = vmatmul.mubr.f32.gmra.mrb[0].mxu0 %v1534
        %v1711 = vpop.f32.mrb[0].mxu0
        %v1712 = vadd.f32 1e-05, %v1711
        %v1713 = vpop.f32.mrb[0].mxu0
        %1714 = vmatprep.mubr.f32.mxu0 0.0
        %1715 = vmatmul.mubr.f32.gmra.mrb[0].mxu0 %v1537
        %v1716 = vpop.f32.mrb[0].mxu0
        %v1717 = vadd.f32 1e-05, %v1716
        %v1718 = vpop.f32.mrb[0].mxu0
        %1719 = vmatprep.mubr.f32.mxu0 0.0
        %1720 = vmatmul.mubr.f32.gmra.mrb[0].mxu0 %v1540
        %v1721 = vpop.f32.mrb[0].mxu0
        %v1722 = vadd.f32 1e-05, %v1721
        %v1723 = vpop.f32.mrb[0].mxu0
        %1724 = vmatprep.mubr.f32.mxu0 0.0
        %1725 = vmatmul.mubr.f32.gmra.mrb[0].mxu0 %v1543
        %v1726 = vpop.f32.mrb[0].mxu0
        %v1727 = vadd.f32 1e-05, %v1726
        %v1728 = vpop.f32.mrb[0].mxu0
        %1729 = vmatprep.mubr.f32.mxu0 0.0
        %1730 = vmatmul.mubr.f32.gmra.mrb[0].mxu0 %v1546
        %v1731 = vpop.f32.mrb[0].mxu0
        %v1732 = vadd.f32 1e-05, %v1731
        %v1733 = vpop.f32.mrb[0].mxu0
        %1734 = vmatprep.mubr.f32.mxu0 0.0
        %1735 = vmatmul.mubr.f32.gmra.mrb[0].mxu0 %v1549
        %v1736 = vpop.f32.mrb[0].mxu0
        %v1737 = vadd.f32 1e-05, %v1736
        %v1738 = vpop.f32.mrb[0].mxu0
        %1739 = vmatprep.mubr.f32.mxu0 0.0
        %1740 = vmatmul.mubr.f32.gmra.mrb[0].mxu0 %v1552
        %v1741 = vpop.f32.mrb[0].mxu0
        %v1742 = vadd.f32 1e-05, %v1741
        %v1743 = vpop.f32.mrb[0].mxu0
        %1744 = vmatprep.mubr.f32.mxu0 0.0
        %1745 = vmatmul.mubr.f32.gmra.mrb[0].mxu0 %v1555
        %v1746 = vpop.f32.mrb[0].mxu0
        %v1747 = vadd.f32 1e-05, %v1746
        %v1748 = vpop.f32.mrb[0].mxu0
        %1749 = vmatprep.mubr.f32.mxu0 0.0
        %1750 = vmatmul.mubr.f32.gmra.mrb[0].mxu0 %v1558
        %v1751 = vpop.f32.mrb[0].mxu0
        %v1752 = vadd.f32 1e-05, %v1751
        %v1753 = vpop.f32.mrb[0].mxu0
        %1754 = vmatprep.mubr.f32.mxu0 0.0
        %1755 = vmatmul.mubr.f32.gmra.mrb[0].mxu0 %v1561
        %v1756 = vpop.f32.mrb[0].mxu0
        %v1757 = vadd.f32 1e-05, %v1756
        %v1758 = vpop.f32.mrb[0].mxu0
        %1759 = vmatprep.mubr.f32.mxu0 0.0
        %1760 = vmatmul.mubr.f32.gmra.mrb[0].mxu0 %v1564
        %v1761 = vpop.f32.mrb[0].mxu0
        %v1762 = vadd.f32 1e-05, %v1761
        %v1763 = vpop.f32.mrb[0].mxu0
        %1764 = vmatprep.mubr.f32.mxu0 0.0
        %1765 = vmatmul.mubr.f32.gmra.mrb[0].mxu0 %v1567
        %v1766 = vpop.f32.mrb[0].mxu0
        %v1767 = vadd.f32 1e-05, %v1766
        %v1768 = vpop.f32.mrb[0].mxu0
        %1769 = vmatprep.mubr.f32.mxu0 0.0
        %1770 = vmatmul.mubr.f32.gmra.mrb[0].mxu0 %v1570
        %v1771 = vpop.f32.mrb[0].mxu0
        %v1772 = vadd.f32 1e-05, %v1771
        %v1773 = vpop.f32.mrb[0].mxu0
        %1774 = vmatprep.mubr.f32.mxu0 0.0
        %1775 = vmatmul.mubr.f32.gmra.mrb[0].mxu0 %v1573
        %v1776 = vpop.f32.mrb[0].mxu0
        %v1777 = vadd.f32 1e-05, %v1776
        %v1778 = vpop.f32.mrb[0].mxu0
        %1779 = vmatprep.mubr.f32.mxu0 0.0
        %1780 = vmatmul.mubr.f32.gmra.mrb[0].mxu0 %v1576
        %v1781 = vpop.f32.mrb[0].mxu0
        %v1782 = vadd.f32 1e-05, %v1781
        %v1783 = vpop.f32.mrb[0].mxu0
        %1784 = vmatprep.mubr.f32.mxu0 0.0
        %1785 = vmatmul.mubr.f32.gmra.mrb[0].mxu0 %v1579
        %v1786 = vpop.f32.mrb[0].mxu0
        %v1787 = vadd.f32 1e-05, %v1786
        %v1788 = vpop.f32.mrb[0].mxu0
        %1789 = vmatprep.mubr.f32.mxu0 0.0
        %1790 = vmatmul.mubr.f32.gmra.mrb[0].mxu0 %v1582
        %v1791 = vpop.f32.mrb[0].mxu0
        %v1792 = vadd.f32 1e-05, %v1791
        %v1793 = vpop.f32.mrb[0].mxu0
        %1794 = vmatprep.mubr.f32.mxu0 0.0
        %1795 = vmatmul.mubr.f32.gmra.mrb[0].mxu0 %v1585
        %v1796 = vpop.f32.mrb[0].mxu0
        %v1797 = vadd.f32 1e-05, %v1796
        %v1798 = vpop.f32.mrb[0].mxu0
        %1799 = vmatprep.mubr.f32.mxu0 0.0
        %1800 = vmatmul.mubr.f32.gmra.mrb[0].mxu0 %v1588
        %v1801 = vpop.f32.mrb[0].mxu0
        %v1802 = vadd.f32 1e-05, %v1801
        %v1803 = vpop.f32.mrb[0].mxu0
        %1804 = vmatprep.mubr.f32.mxu0 0.0
        %1805 = vmatmul.mubr.f32.gmra.mrb[0].mxu0 %v1591
        %v1806 = vpop.f32.mrb[0].mxu0
        %v1807 = vadd.f32 1e-05, %v1806
        %v1808 = vpop.f32.mrb[0].mxu0
        %1809 = vmatprep.mubr.f32.mxu0 0.0
        %1810 = vmatmul.mubr.f32.gmra.mrb[0].mxu0 %v1594
        %v1811 = vpop.f32.mrb[0].mxu0
        %v1812 = vadd.f32 1e-05, %v1811
        %v1813 = vpop.f32.mrb[0].mxu0
        %1814 = vmatprep.mubr.f32.mxu0 0.0
        %1815 = vmatmul.mubr.f32.gmra.mrb[0].mxu0 %v1597
        %v1816 = vpop.f32.mrb[0].mxu0
        %v1817 = vadd.f32 1e-05, %v1816
        %v1818 = vpop.f32.mrb[0].mxu0
        %1819 = vmatprep.mubr.f32.mxu0 0.0
        %1820 = vmatmul.mubr.f32.gmra.mrb[0].mxu0 %v1600
        %v1821 = vpop.f32.mrb[0].mxu0
        %v1822 = vadd.f32 1e-05, %v1821
        %v1823 = vpop.f32.mrb[0].mxu0
        %1824 = vmatprep.mubr.f32.mxu0 0.0
        %1825 = vmatmul.mubr.f32.gmra.mrb[0].mxu0 %v1603
        %v1826 = vpop.f32.mrb[0].mxu0
        %v1827 = vadd.f32 1e-05, %v1826
        %v1828 = vpop.f32.mrb[0].mxu0
        %1829 = vdwg.mxu0
        %v1830 = vrsqrt.pop %v1672
        %v1831 = vrsqrt.pop %v1677
        %v1832 = vrsqrt.pop %v1682
        %v1833 = vrsqrt.pop %v1687
        %v1834 = vrsqrt.pop %v1692
        %v1835 = vrsqrt.pop %v1697
        %v1836 = vrsqrt.pop %v1702
        %v1837 = vrsqrt.pop %v1707
        %v1838 = vrsqrt.pop %v1712
        %v1839 = vrsqrt.pop %v1717
        %v1840 = vrsqrt.pop %v1722
        %v1841 = vrsqrt.pop %v1727
        %v1842 = vrsqrt.pop %v1732
        %v1843 = vrsqrt.pop %v1737
        %v1844 = vrsqrt.pop %v1742
        %v1845 = vrsqrt.pop %v1747
        %v1846 = vrsqrt.pop %v1752
        %v1847 = vrsqrt.pop %v1757
        %v1848 = vrsqrt.pop %v1762
        %v1849 = vrsqrt.pop %v1767
        %v1850 = vrsqrt.pop %v1772
        %v1851 = vrsqrt.pop %v1777
        %v1852 = vrsqrt.pop %v1782
        %v1853 = vrsqrt.pop %v1787
        %v1854 = vrsqrt.pop %v1792
        %v1855 = vrsqrt.pop %v1797
        %v1856 = vrsqrt.pop %v1802
        %v1857 = vrsqrt.pop %v1807
        %v1858 = vrsqrt.pop %v1812
        %v1859 = vrsqrt.pop %v1817
        %v1860 = vrsqrt.pop %v1822
        %v1861 = vrsqrt.pop %v1827
        %v1862 = vmul.f32 %v1220, %v1830
        %v1863 = vmul.f32 %v1221, %v1831
        %v1864 = vmul.f32 %v1222, %v1832
        %v1865 = vmul.f32 %v1223, %v1833
        %v1866 = vmul.f32 %v1224, %v1834
        %v1867 = vmul.f32 %v1225, %v1835
        %v1868 = vmul.f32 %v1226, %v1836
        %v1869 = vmul.f32 %v1227, %v1837
        %v1870 = vmul.f32 %v1228, %v1838
        %v1871 = vmul.f32 %v1229, %v1839
        %v1872 = vmul.f32 %v1230, %v1840
        %v1873 = vmul.f32 %v1231, %v1841
        %v1874 = vmul.f32 %v1232, %v1842
        %v1875 = vmul.f32 %v1233, %v1843
        %v1876 = vmul.f32 %v1234, %v1844
        %v1877 = vmul.f32 %v1235, %v1845
        %v1878 = vmul.f32 %v1236, %v1846
        %v1879 = vmul.f32 %v1237, %v1847
        %v1880 = vmul.f32 %v1238, %v1848
        %v1881 = vmul.f32 %v1239, %v1849
        %v1882 = vmul.f32 %v1240, %v1850
        %v1883 = vmul.f32 %v1241, %v1851
        %v1884 = vmul.f32 %v1242, %v1852
        %v1885 = vmul.f32 %v1243, %v1853
        %v1886 = vmul.f32 %v1244, %v1854
        %v1887 = vmul.f32 %v1245, %v1855
        %v1888 = vmul.f32 %v1246, %v1856
        %v1889 = vmul.f32 %v1247, %v1857
        %v1890 = vmul.f32 %v1248, %v1858
        %v1891 = vmul.f32 %v1249, %v1859
        %v1892 = vmul.f32 %v1250, %v1860
        %v1893 = vmul.f32 %v1251, %v1861
        %v1894 = vld [vmem:[#allocation8] sm:$0x1]
        %v1896 = vlaneseq
        %v1897 = vshrl.u32 %v1896, 7
        %v1898 = vsub.s32 0, %v1897
        %v1899 = vrot.slane %v1894, %v1898
        %v1901 = vmul.f32 %v1862, %v1899
        %v1902 = vmul.f32 %v1863, %v1899
        %v1903 = vmul.f32 %v1864, %v1899
        %v1904 = vmul.f32 %v1865, %v1899
        %v1905 = vmul.f32 %v1866, %v1899
        %v1906 = vmul.f32 %v1867, %v1899
        %v1907 = vmul.f32 %v1868, %v1899
        %v1908 = vmul.f32 %v1869, %v1899
        %v1909 = vmul.f32 %v1870, %v1899
        %v1910 = vmul.f32 %v1871, %v1899
        %v1911 = vmul.f32 %v1872, %v1899
        %v1912 = vmul.f32 %v1873, %v1899
        %v1913 = vmul.f32 %v1874, %v1899
        %v1914 = vmul.f32 %v1875, %v1899
        %v1915 = vmul.f32 %v1876, %v1899
        %v1916 = vmul.f32 %v1877, %v1899
        %v1917 = vmul.f32 %v1878, %v1899
        %v1918 = vmul.f32 %v1879, %v1899
        %v1919 = vmul.f32 %v1880, %v1899
        %v1920 = vmul.f32 %v1881, %v1899
        %v1921 = vmul.f32 %v1882, %v1899
        %v1922 = vmul.f32 %v1883, %v1899
        %v1923 = vmul.f32 %v1884, %v1899
        %v1924 = vmul.f32 %v1885, %v1899
        %v1925 = vmul.f32 %v1886, %v1899
        %v1926 = vmul.f32 %v1887, %v1899
        %v1927 = vmul.f32 %v1888, %v1899
        %v1928 = vmul.f32 %v1889, %v1899
        %v1929 = vmul.f32 %v1890, %v1899
        %v1930 = vmul.f32 %v1891, %v1899
        %v1931 = vmul.f32 %v1892, %v1899
        %v1932 = vmul.f32 %v1893, %v1899
        %v1933 = vld [vmem:[#allocation10] sm:$0x1]
        %v1935 = vlaneseq
        %v1936 = vshrl.u32 %v1935, 7
        %v1937 = vsub.s32 0, %v1936
        %v1938 = vrot.slane %v1933, %v1937
        %v1940 = vadd.f32 %v1901, %v1938
        %v1941 = vadd.f32 %v1902, %v1938
        %v1942 = vadd.f32 %v1903, %v1938
        %v1943 = vadd.f32 %v1904, %v1938
        %v1944 = vadd.f32 %v1905, %v1938
        %v1945 = vadd.f32 %v1906, %v1938
        %v1946 = vadd.f32 %v1907, %v1938
        %v1947 = vadd.f32 %v1908, %v1938
        %v1948 = vadd.f32 %v1909, %v1938
        %v1949 = vadd.f32 %v1910, %v1938
        %v1950 = vadd.f32 %v1911, %v1938
        %v1951 = vadd.f32 %v1912, %v1938
        %v1952 = vadd.f32 %v1913, %v1938
        %v1953 = vadd.f32 %v1914, %v1938
        %v1954 = vadd.f32 %v1915, %v1938
        %v1955 = vadd.f32 %v1916, %v1938
        %v1956 = vadd.f32 %v1917, %v1938
        %v1957 = vadd.f32 %v1918, %v1938
        %v1958 = vadd.f32 %v1919, %v1938
        %v1959 = vadd.f32 %v1920, %v1938
        %v1960 = vadd.f32 %v1921, %v1938
        %v1961 = vadd.f32 %v1922, %v1938
        %v1962 = vadd.f32 %v1923, %v1938
        %v1963 = vadd.f32 %v1924, %v1938
        %v1964 = vadd.f32 %v1925, %v1938
        %v1965 = vadd.f32 %v1926, %v1938
        %v1966 = vadd.f32 %v1927, %v1938
        %v1967 = vadd.f32 %v1928, %v1938
        %v1968 = vadd.f32 %v1929, %v1938
        %v1969 = vadd.f32 %v1930, %v1938
        %v1970 = vadd.f32 %v1931, %v1938
        %v1971 = vadd.f32 %v1932, %v1938
        %vm1972 = vcmask 523264
        %1973 = vst.msk [vmem:[%s389] sm:$0xff] %vm1972, %v1940
        %1974 = vst.msk [vmem:[%s389 + $0x8] sm:$0xff] %vm1972, %v1941
        %1977 = vrot.lane.b32.xlu0 %v1940, 64
        %v1978 = vpop.permute.xlu0 %1977
        %1979 = vrot.lane.b32.xlu0 %v1941, 64
        %v1980 = vpop.permute.xlu0 %1979
        %s1983 = scalar_lea.vmem %s389, 16 [#allocation14]
        %1984 = vst.msk [vmem:[%s1983] sm:$0xff] %vm1972, %v1978
        %1985 = vst.msk [vmem:[%s1983 + $0x8] sm:$0xff] %vm1972, %v1980
        %s1986 = scalar_lea.vmem %s389, 32 [#allocation14]
        %1987 = vst.msk [vmem:[%s1986] sm:$0xff] %vm1972, %v1942
        %1988 = vst.msk [vmem:[%s1986 + $0x8] sm:$0xff] %vm1972, %v1943
        %1991 = vrot.lane.b32.xlu0 %v1942, 64
        %v1992 = vpop.permute.xlu0 %1991
        %1993 = vrot.lane.b32.xlu0 %v1943, 64
        %v1994 = vpop.permute.xlu0 %1993
        %s1997 = scalar_lea.vmem %s389, 48 [#allocation14]
        %1998 = vst.msk [vmem:[%s1997] sm:$0xff] %vm1972, %v1992
        %1999 = vst.msk [vmem:[%s1997 + $0x8] sm:$0xff] %vm1972, %v1994
        %s2000 = scalar_lea.vmem %s389, 64 [#allocation14]
        %2001 = vst.msk [vmem:[%s2000] sm:$0xff] %vm1972, %v1944
        %2002 = vst.msk [vmem:[%s2000 + $0x8] sm:$0xff] %vm1972, %v1945
        %2005 = vrot.lane.b32.xlu0 %v1944, 64
        %v2006 = vpop.permute.xlu0 %2005
        %2007 = vrot.lane.b32.xlu0 %v1945, 64
        %v2008 = vpop.permute.xlu0 %2007
        %s2011 = scalar_lea.vmem %s389, 80 [#allocation14]
        %2012 = vst.msk [vmem:[%s2011] sm:$0xff] %vm1972, %v2006
        %2013 = vst.msk [vmem:[%s2011 + $0x8] sm:$0xff] %vm1972, %v2008
        %s2014 = scalar_lea.vmem %s389, 96 [#allocation14]
        %2015 = vst.msk [vmem:[%s2014] sm:$0xff] %vm1972, %v1946
        %2016 = vst.msk [vmem:[%s2014 + $0x8] sm:$0xff] %vm1972, %v1947
        %2019 = vrot.lane.b32.xlu0 %v1946, 64
        %v2020 = vpop.permute.xlu0 %2019
        %2021 = vrot.lane.b32.xlu0 %v1947, 64
        %v2022 = vpop.permute.xlu0 %2021
        %s2025 = scalar_lea.vmem %s389, 112 [#allocation14]
        %2026 = vst.msk [vmem:[%s2025] sm:$0xff] %vm1972, %v2020
        %2027 = vst.msk [vmem:[%s2025 + $0x8] sm:$0xff] %vm1972, %v2022
        %s2028 = scalar_lea.vmem %s389, 128 [#allocation14]
        %2029 = vst.msk [vmem:[%s2028] sm:$0xff] %vm1972, %v1948
        %2030 = vst.msk [vmem:[%s2028 + $0x8] sm:$0xff] %vm1972, %v1949
        %2033 = vrot.lane.b32.xlu0 %v1948, 64
        %v2034 = vpop.permute.xlu0 %2033
        %2035 = vrot.lane.b32.xlu0 %v1949, 64
        %v2036 = vpop.permute.xlu0 %2035
        %s2039 = scalar_lea.vmem %s389, 144 [#allocation14]
        %2040 = vst.msk [vmem:[%s2039] sm:$0xff] %vm1972, %v2034
        %2041 = vst.msk [vmem:[%s2039 + $0x8] sm:$0xff] %vm1972, %v2036
        %s2042 = scalar_lea.vmem %s389, 160 [#allocation14]
        %2043 = vst.msk [vmem:[%s2042] sm:$0xff] %vm1972, %v1950
        %2044 = vst.msk [vmem:[%s2042 + $0x8] sm:$0xff] %vm1972, %v1951
        %2047 = vrot.lane.b32.xlu0 %v1950, 64
        %v2048 = vpop.permute.xlu0 %2047
        %2049 = vrot.lane.b32.xlu0 %v1951, 64
        %v2050 = vpop.permute.xlu0 %2049
        %s2053 = scalar_lea.vmem %s389, 176 [#allocation14]
        %2054 = vst.msk [vmem:[%s2053] sm:$0xff] %vm1972, %v2048
        %2055 = vst.msk [vmem:[%s2053 + $0x8] sm:$0xff] %vm1972, %v2050
        %s2056 = scalar_lea.vmem %s389, 192 [#allocation14]
        %2057 = vst.msk [vmem:[%s2056] sm:$0xff] %vm1972, %v1952
        %2058 = vst.msk [vmem:[%s2056 + $0x8] sm:$0xff] %vm1972, %v1953
        %2061 = vrot.lane.b32.xlu0 %v1952, 64
        %v2062 = vpop.permute.xlu0 %2061
        %2063 = vrot.lane.b32.xlu0 %v1953, 64
        %v2064 = vpop.permute.xlu0 %2063
        %s2067 = scalar_lea.vmem %s389, 208 [#allocation14]
        %2068 = vst.msk [vmem:[%s2067] sm:$0xff] %vm1972, %v2062
        %2069 = vst.msk [vmem:[%s2067 + $0x8] sm:$0xff] %vm1972, %v2064
        %s2070 = scalar_lea.vmem %s389, 224 [#allocation14]
        %2071 = vst.msk [vmem:[%s2070] sm:$0xff] %vm1972, %v1954
        %2072 = vst.msk [vmem:[%s2070 + $0x8] sm:$0xff] %vm1972, %v1955
        %2075 = vrot.lane.b32.xlu0 %v1954, 64
        %v2076 = vpop.permute.xlu0 %2075
        %2077 = vrot.lane.b32.xlu0 %v1955, 64
        %v2078 = vpop.permute.xlu0 %2077
        %s2081 = scalar_lea.vmem %s389, 240 [#allocation14]
        %2082 = vst.msk [vmem:[%s2081] sm:$0xff] %vm1972, %v2076
        %2083 = vst.msk [vmem:[%s2081 + $0x8] sm:$0xff] %vm1972, %v2078
        %s2084 = scalar_lea.vmem %s389, 256 [#allocation14]
        %2085 = vst.msk [vmem:[%s2084] sm:$0xff] %vm1972, %v1956
        %2086 = vst.msk [vmem:[%s2084 + $0x8] sm:$0xff] %vm1972, %v1957
        %2089 = vrot.lane.b32.xlu0 %v1956, 64
        %v2090 = vpop.permute.xlu0 %2089
        %2091 = vrot.lane.b32.xlu0 %v1957, 64
        %v2092 = vpop.permute.xlu0 %2091
        %s2095 = scalar_lea.vmem %s389, 272 [#allocation14]
        %2096 = vst.msk [vmem:[%s2095] sm:$0xff] %vm1972, %v2090
        %2097 = vst.msk [vmem:[%s2095 + $0x8] sm:$0xff] %vm1972, %v2092
        %s2098 = scalar_lea.vmem %s389, 288 [#allocation14]
        %2099 = vst.msk [vmem:[%s2098] sm:$0xff] %vm1972, %v1958
        %2100 = vst.msk [vmem:[%s2098 + $0x8] sm:$0xff] %vm1972, %v1959
        %2103 = vrot.lane.b32.xlu0 %v1958, 64
        %v2104 = vpop.permute.xlu0 %2103
        %2105 = vrot.lane.b32.xlu0 %v1959, 64
        %v2106 = vpop.permute.xlu0 %2105
        %s2109 = scalar_lea.vmem %s389, 304 [#allocation14]
        %2110 = vst.msk [vmem:[%s2109] sm:$0xff] %vm1972, %v2104
        %2111 = vst.msk [vmem:[%s2109 + $0x8] sm:$0xff] %vm1972, %v2106
        %s2112 = scalar_lea.vmem %s389, 320 [#allocation14]
        %2113 = vst.msk [vmem:[%s2112] sm:$0xff] %vm1972, %v1960
        %2114 = vst.msk [vmem:[%s2112 + $0x8] sm:$0xff] %vm1972, %v1961
        %2117 = vrot.lane.b32.xlu0 %v1960, 64
        %v2118 = vpop.permute.xlu0 %2117
        %2119 = vrot.lane.b32.xlu0 %v1961, 64
        %v2120 = vpop.permute.xlu0 %2119
        %s2123 = scalar_lea.vmem %s389, 336 [#allocation14]
        %2124 = vst.msk [vmem:[%s2123] sm:$0xff] %vm1972, %v2118
        %2125 = vst.msk [vmem:[%s2123 + $0x8] sm:$0xff] %vm1972, %v2120
        %s2126 = scalar_lea.vmem %s389, 352 [#allocation14]
        %2127 = vst.msk [vmem:[%s2126] sm:$0xff] %vm1972, %v1962
        %2128 = vst.msk [vmem:[%s2126 + $0x8] sm:$0xff] %vm1972, %v1963
        %2131 = vrot.lane.b32.xlu0 %v1962, 64
        %v2132 = vpop.permute.xlu0 %2131
        %2133 = vrot.lane.b32.xlu0 %v1963, 64
        %v2134 = vpop.permute.xlu0 %2133
        %s2137 = scalar_lea.vmem %s389, 368 [#allocation14]
        %2138 = vst.msk [vmem:[%s2137] sm:$0xff] %vm1972, %v2132
        %2139 = vst.msk [vmem:[%s2137 + $0x8] sm:$0xff] %vm1972, %v2134
        %s2140 = scalar_lea.vmem %s389, 384 [#allocation14]
        %2141 = vst.msk [vmem:[%s2140] sm:$0xff] %vm1972, %v1964
        %2142 = vst.msk [vmem:[%s2140 + $0x8] sm:$0xff] %vm1972, %v1965
        %2145 = vrot.lane.b32.xlu0 %v1964, 64
        %v2146 = vpop.permute.xlu0 %2145
        %2147 = vrot.lane.b32.xlu0 %v1965, 64
        %v2148 = vpop.permute.xlu0 %2147
        %s2151 = scalar_lea.vmem %s389, 400 [#allocation14]
        %2152 = vst.msk [vmem:[%s2151] sm:$0xff] %vm1972, %v2146
        %2153 = vst.msk [vmem:[%s2151 + $0x8] sm:$0xff] %vm1972, %v2148
        %s2154 = scalar_lea.vmem %s389, 416 [#allocation14]
        %2155 = vst.msk [vmem:[%s2154] sm:$0xff] %vm1972, %v1966
        %2156 = vst.msk [vmem:[%s2154 + $0x8] sm:$0xff] %vm1972, %v1967
        %2159 = vrot.lane.b32.xlu0 %v1966, 64
        %v2160 = vpop.permute.xlu0 %2159
        %2161 = vrot.lane.b32.xlu0 %v1967, 64
        %v2162 = vpop.permute.xlu0 %2161
        %s2165 = scalar_lea.vmem %s389, 432 [#allocation14]
        %2166 = vst.msk [vmem:[%s2165] sm:$0xff] %vm1972, %v2160
        %2167 = vst.msk [vmem:[%s2165 + $0x8] sm:$0xff] %vm1972, %v2162
        %s2168 = scalar_lea.vmem %s389, 448 [#allocation14]
        %2169 = vst.msk [vmem:[%s2168] sm:$0xff] %vm1972, %v1968
        %2170 = vst.msk [vmem:[%s2168 + $0x8] sm:$0xff] %vm1972, %v1969
        %2173 = vrot.lane.b32.xlu0 %v1968, 64
        %v2174 = vpop.permute.xlu0 %2173
        %2175 = vrot.lane.b32.xlu0 %v1969, 64
        %v2176 = vpop.permute.xlu0 %2175
        %s2179 = scalar_lea.vmem %s389, 464 [#allocation14]
        %2180 = vst.msk [vmem:[%s2179] sm:$0xff] %vm1972, %v2174
        %2181 = vst.msk [vmem:[%s2179 + $0x8] sm:$0xff] %vm1972, %v2176
        %s2182 = scalar_lea.vmem %s389, 480 [#allocation14]
        %2183 = vst.msk [vmem:[%s2182] sm:$0xff] %vm1972, %v1970
        %2184 = vst.msk [vmem:[%s2182 + $0x8] sm:$0xff] %vm1972, %v1971
        %2187 = vrot.lane.b32.xlu0 %v1970, 64
        %v2188 = vpop.permute.xlu0 %2187
        %2189 = vrot.lane.b32.xlu0 %v1971, 64
        %v2190 = vpop.permute.xlu0 %2189
        %s2193 = scalar_lea.vmem %s389, 496 [#allocation14]
        %2194 = vst.msk [vmem:[%s2193] sm:$0xff] %vm1972, %v2188
        %2195 = vst.msk [vmem:[%s2193 + $0x8] sm:$0xff] %vm1972, %v2190
        %s2196 = sand.u32 %s203, 1
        %s2197 = scalar_lea.sflag [#allocation4], %s2196
        %s2198 = sand.u32 %s203, 1
        %s2199 = smul.addr %s2198, 512
        %s2200 = scalar_lea.vmem [#allocation14], %s2199
        // Predicated region
        $region77: #{tpu_custom_call.1} parent=47 // pred_check
          %p2201 = pneg %p213
        $region78: #{tpu_custom_call.1} parent=47 // pred_check_branch
          %2203 = sbr.rel (%p2201) target = $region80
        $region79: #{tpu_custom_call.1} parent=47 // pred_region
          %s2204 = smul.u32 16, %s32
          %s2206 = ssub.s32 8192, 8192
          %2207 = vsyncadd %s2197, %s2206
          %s2208 = smul.addr %s2204, 4
          %s2209 = smul.addr %s31, 64
          %s2210 = sadd.s32 %s2208, %s2209
          %s2211 = smul.addr %s2210, 128
          %s2212 = scalar_lea.hbm %s7, %s2211
          %s2213 = sshll.u32 %s2200, 4
          %s2214 = int_to_ptr.vmem [resolvable:$true] %s2213
          %2219 = dma.vmem_to_hbm [thread:$0]  %s2214, 8192, %s2212, %s2197, 128, 128, 8
        $region80: #{tpu_custom_call.1} parent=47 // pred_fallthru
          _
      $region48: #{tpu_custom_call.1} parent=5 // pred_fallthru
        _
      %p2220 = scmp.le.s32.totalorder 2, %s22
      // Predicated region
      $region81: #{tpu_custom_call.1} parent=5 // pred_check
        %p2221 = pneg %p2220
      $region82: #{tpu_custom_call.1} parent=5 // pred_check_branch
        %2223 = sbr.rel (%p2221) target = $region84
      $region83: #{tpu_custom_call.1} parent=5 // pred_region
        %s2224 = ssub.s32 %s22, 2
        // Predicated region
        $region85: #{tpu_custom_call.1} parent=83 // pred_check
          %p2225 = pneg %p219
        $region86: #{tpu_custom_call.1} parent=83 // pred_check_branch
          %2227 = sbr.rel (%p2225) target = $region88
        $region87: #{tpu_custom_call.1} parent=83 // pred_region
          %s2228 = sand.u32 %s204, 1
          %s2229 = scalar_lea.sflag [#allocation4], %s2228
          %s2230 = sand.u32 %s204, 1
          %s2231 = smul.addr %s2230, 512
          %s2232 = scalar_lea.vmem [#allocation14], %s2231
          %2233 = dma.done %s2229, 8192
        $region88: #{tpu_custom_call.1} parent=83 // pred_fallthru
          _
      $region84: #{tpu_custom_call.1} parent=5 // pred_fallthru
        _
    $region6: #{tpu_custom_call.1} parent=1 // loop_footer
      %s26 = sadd.s32 1, %s22
    $region7: #{tpu_custom_call.1} parent=1 // loop_footer_branch
      %21 = sbr.rel target = $region3
    $region8: #{tpu_custom_call.1} parent=1 // loop_exit
      _
    %2234 = vsyncpa [#allocation3], 1
    %s2235 = scalar_lea.sflag [#allocation3], 1
    %2236 = vsyncpa %s2235, 1
    %2237 = vsyncpa [#allocation6], 1
    %2238 = vsyncpa [#allocation9], 1
    %2239 = vsyncpa [#allocation12], 1
    %2240 = vsyncpa [#allocation4], 1
    %s2241 = scalar_lea.sflag [#allocation4], 1
    %2242 = vsyncpa %s2241, 1

</llo_original>
